<compile_context>
chip_gen: v5e
topology: v5e:2x2
jax: 0.10.0
libtpu: 0.0.40
codegen_flags: <defaults>
</compile_context>

<pallas_src>
import math

import jax
import jax.numpy as jnp
import numpy as np
from jax.experimental import pallas as pl
from jax.experimental.pallas import tpu as pltpu


_MAX_ROW_UNROLL = 64  # cap on statically unrolled output rows per grid step


def _round_up(x, m):
    return ((x + m - 1) // m) * m


def _vmem_limits():
    """Generation-aware VMEM limit + tile budget (conservative fallback)."""
    try:
        cap = int(pltpu.get_tpu_info().vmem_capacity_bytes)
    except Exception:
        cap = 64 * 1024 * 1024  # v7x-sized fallback (smallest current gen)
    limit = int(min(96 * 1024 * 1024, (3 * cap) // 4))
    budget = int(max(8 * 1024 * 1024, limit // 3))
    return limit, budget


def _pick_h_blk(n, h, w, cin, cout, x_isz, o_isz, vmem_budget):
    """Rows of the input image processed per grid step.

    Constraints: out block (h_blk, 4W) needs h_blk % 8 == 0 (or == H); the
    flat input block needs (h_blk*W) % 128 == 0 (or == H*W).
    """
    h_unit = max(8, 128 // math.gcd(w, 128))
    if h_unit >= h or h_unit > _MAX_ROW_UNROLL:
        return h  # whole image height per step (full dims are always legal)

    # Per-row VMEM bytes: double-buffered input rows (sublane-padded Cin),
    # double-buffered output rows (lane-padded 4W), f32 matmul accumulator.
    per_row = (2 * _round_up(cin, 8) * w * x_isz
               + 2 * cout * _round_up(4 * w, 128) * o_isz
               + 4 * cout * w * 4)
    fixed = 4 * w * (4 * w) * 4 + 2 * (4 * cout * cin * x_isz + cout * 4)
    budget = max(vmem_budget - fixed, per_row * h_unit)

    hb = (budget // per_row) // h_unit * h_unit
    hb = min(hb, (_MAX_ROW_UNROLL // h_unit) * h_unit, (h // h_unit) * h_unit)
    hb = max(hb, h_unit)

    # Keep >= 4 grid steps when possible (2 TensorCores on v7x + pipelining).
    while n * ((h + hb - 1) // hb) < 4 and hb > h_unit:
        hb -= h_unit
    return int(hb)


def _make_kernel(cout, width, h_blk):
    w = width

    def kernel(x_ref, w_ref, b_ref, o_ref):
        # x_ref: (1, Cin, h_blk*W)   lane-dense input rows
        # w_ref: (4*Cout, Cin)       rows ordered (tap = 2*ki + kj, co)
        # b_ref: (Cout, 1)           float32 bias
        # o_ref: (1, Cout, h_blk, 4*W); column q = ki*2W + 2j + kj
        x = x_ref[0]                                        # (Cin, h_blk*W)
        acc = jnp.dot(w_ref[...], x,
                      preferred_element_type=jnp.float32)   # (4Cout, h_blk*W)

        # Constant 0/1 scatter matrices: F_tap[j, q] = 1 iff q == ki*2W+2j+kj.
        j_ids = jax.lax.broadcasted_iota(jnp.int32, (w, 4 * w), 0)
        q_ids = jax.lax.broadcasted_iota(jnp.int32, (w, 4 * w), 1)
        f_taps = [
            (q_ids == (ki * 2 * w + 2 * j_ids + kj)).astype(jnp.float32)
            for ki in range(2) for kj in range(2)
        ]

        bias = b_ref[...]                                   # (Cout, 1)

        # Static per-row unroll: the scatter matmuls ride the idle MXU and the
        # whole epilogue hides under the HBM DMA of this memory-bound op.
        for i in range(h_blk):
            acc_i = acc[:, i * w:(i + 1) * w]               # (4Cout, W)
            out_i = bias                                    # bias-initialized
            for tap in range(4):
                t = acc_i[tap * cout:(tap + 1) * cout, :]   # (Cout, W)
                out_i = out_i + jnp.dot(
                    t, f_taps[tap], preferred_element_type=jnp.float32)
            o_ref[0, :, i:i + 1, :] = out_i[:, None, :].astype(o_ref.dtype)

    return kernel


def upsample_forward(x_nchw, weight, bias, *, compute_dtype=None):
    """ConvTranspose2d(kernel=2, stride=2) forward, NCHW in / NCHW out.

    x_nchw : (N, Cin, H, W)
    weight : (Cin, Cout, 2, 2)   -- PyTorch ConvTranspose2d weight layout
    bias   : (Cout,)
    compute_dtype: optionally cast the streamed x / W (e.g. jnp.bfloat16 on
        v6e/v7x) to halve streamed HBM bytes; accumulation stays f32 in-kernel
        and the output keeps x's original dtype (slightly lossier than pure
        f32 -- documented, not default).
    """
    n, cin, h, w = x_nchw.shape
    cout = weight.shape[1]
    k4 = 4 * cout
    out_dtype = x_nchw.dtype

    # Free views / tiny host-side transforms (no pass over the big tensors).
    x3 = x_nchw.reshape(n, cin, h * w)
    w_t = jnp.transpose(weight, (2, 3, 1, 0)).reshape(k4, cin)  # rows (ki,kj,co)
    b_col = bias.reshape(cout, 1).astype(jnp.float32)

    if compute_dtype is not None:
        x3 = x3.astype(compute_dtype)
        w_t = w_t.astype(compute_dtype)

    x_isz = jnp.dtype(x3.dtype).itemsize
    o_isz = jnp.dtype(out_dtype).itemsize
    vmem_limit, vmem_budget = _vmem_limits()
    h_blk = _pick_h_blk(n, h, w, cin, cout, x_isz, o_isz, vmem_budget)
    n_h = pl.cdiv(h, h_blk)
    blk_s = h_blk * w

    cost = pl.CostEstimate(
        flops=2 * n * h * w * cin * k4 + 32 * n * cout * h * w * w,
        transcendentals=0,
        bytes_accessed=(x_isz * (n * cin * h * w + k4 * cin)
                        + 4 * cout
                        + o_isz * (n * cout * 4 * h * w)),
    )

    y4 = pl.pallas_call(
        _make_kernel(cout, w, h_blk),
        out_shape=jax.ShapeDtypeStruct((n, cout, h, 4 * w), out_dtype),
        grid_spec=pltpu.PrefetchScalarGridSpec(
            num_scalar_prefetch=0,
            grid=(n, n_h),
            in_specs=[
                pl.BlockSpec((1, cin, blk_s), lambda ni, hi: (ni, 0, hi)),
                pl.BlockSpec((k4, cin), lambda ni, hi: (0, 0)),   # resident
                pl.BlockSpec((cout, 1), lambda ni, hi: (0, 0)),   # resident
            ],
            out_specs=pl.BlockSpec((1, cout, h_blk, 4 * w),
                                   lambda ni, hi: (ni, 0, hi, 0)),
        ),
        compiler_params=pltpu.CompilerParams(
            dimension_semantics=("parallel", "parallel"),
            vmem_limit_bytes=vmem_limit,
        ),
        cost_estimate=cost,
    )(x3, w_t, b_col)

    # (N, Cout, H, 4W) is memory-identical to NCHW (N, Cout, 2H, 2W): free.
    return y4.reshape(n, cout, 2 * h, 2 * w)


if __name__ == "__main__":
    key = jax.random.PRNGKey(0)
    k_x, k_w, k_b = jax.random.split(key, 3)

    N, CIN, COUT, H, W = 2, 4, 8, 16, 16
    x = jax.random.normal(k_x, (N, CIN, H, W), dtype=jnp.float32)
    # PyTorch shapes: weight (Cin, Cout, 2, 2), bias (Cout,)
    weight = jax.random.normal(k_w, (CIN, COUT, 2, 2), dtype=jnp.float32) * 0.1
    bias = jax.random.normal(k_b, (COUT,), dtype=jnp.float32) * 0.1

    fwd = jax.jit(upsample_forward)
    out = jax.block_until_ready(fwd(x, weight, bias))
    assert out.shape == (N, COUT, 2 * H, 2 * W), out.shape

    # Exact float64 numpy reference of ConvTranspose2d(kernel=2, stride=2).
    xn = np.asarray(x, dtype=np.float64)
    wn = np.asarray(weight, dtype=np.float64)
    bn = np.asarray(bias, dtype=np.float64)
    ref = np.einsum("nihw,iokl->nohkwl", xn, wn).reshape(N, COUT, 2 * H, 2 * W)
    ref = ref + bn[None, :, None, None]
    # Tolerance leaves headroom for MXU f32 rounding modes across generations.
    np.testing.assert_allclose(np.asarray(out, dtype=np.float64), ref,
                               atol=5e-3, rtol=5e-3)

    print("KERNEL_OK")
</pallas_src>

<mosaic_0001>
module attributes {stable_mosaic.version = 11 : i64} {
  func.func @kernel(%arg0: i32, %arg1: i32, %arg2: memref<1x4x128xf32, #tpu.memory_space<vmem>>, %arg3: memref<32x4xf32, #tpu.memory_space<vmem>>, %arg4: memref<8x1xf32, #tpu.memory_space<vmem>>, %arg5: memref<1x8x8x64xf32, #tpu.memory_space<vmem>>) attributes {dimension_semantics = [#tpu.dimension_semantics<parallel>, #tpu.dimension_semantics<parallel>], iteration_bounds = array<i64: 2, 2>, scalar_prefetch = 0 : i64, scratch_operands = 0 : i64, tpu.core_type = #tpu.core_type<tc>, window_params = [{transform_indices = @transform_0, window_bounds = array<i64: 1, 4, 128>}, {pipeline_mode = #tpu.pipeline_mode<synchronous>, transform_indices = @transform_1, window_bounds = array<i64: 32, 4>}, {pipeline_mode = #tpu.pipeline_mode<synchronous>, transform_indices = @transform_2, window_bounds = array<i64: 8, 1>}, {transform_indices = @transform_3, window_bounds = array<i64: 1, 8, 8, 64>}]} {
    %c0 = arith.constant 0 : index
    %c0_0 = arith.constant 0 : index
    %c0_1 = arith.constant 0 : index
    %0 = vector.load %arg2[%c0, %c0_0, %c0_1] : memref<1x4x128xf32, #tpu.memory_space<vmem>>, vector<1x4x128xf32>
    %1 = vector.shape_cast %0 : vector<1x4x128xf32> to vector<4x128xf32>
    %c0_2 = arith.constant 0 : index
    %c0_3 = arith.constant 0 : index
    %2 = vector.load %arg3[%c0_2, %c0_3] : memref<32x4xf32, #tpu.memory_space<vmem>>, vector<32x4xf32>
    %cst = arith.constant dense<0.000000e+00> : vector<32x128xf32>
    %3 = tpu.matmul %2, %1, %cst {dimension_numbers = #tpu.dot_dimension_numbers<[1], [0], [0], [1], [0, 0, 1, 1], [], []>} : vector<32x4xf32>, vector<4x128xf32>, vector<32x128xf32> -> vector<32x128xf32>
    %4 = tpu.iota {dimensions = array<i32: 0>} : vector<16x64xi32>
    %5 = tpu.iota {dimensions = array<i32: 1>} : vector<16x64xi32>
    %c2_i32 = arith.constant 2 : i32
    %6 = vector.broadcast %c2_i32 : i32 to vector<16x64xi32>
    %7 = arith.muli %6, %4 : vector<16x64xi32>
    %c0_i32 = arith.constant 0 : i32
    %8 = vector.broadcast %c0_i32 : i32 to vector<16x64xi32>
    %9 = arith.addi %8, %7 : vector<16x64xi32>
    %c0_i32_4 = arith.constant 0 : i32
    %10 = vector.broadcast %c0_i32_4 : i32 to vector<16x64xi32>
    %11 = arith.addi %9, %10 : vector<16x64xi32>
    %12 = arith.cmpi eq, %5, %11 : vector<16x64xi32>
    %13 = arith.extui %12 : vector<16x64xi1> to vector<16x64xi32>
    %14 = arith.sitofp %13 : vector<16x64xi32> to vector<16x64xf32>
    %c2_i32_5 = arith.constant 2 : i32
    %15 = vector.broadcast %c2_i32_5 : i32 to vector<16x64xi32>
    %16 = arith.muli %15, %4 : vector<16x64xi32>
    %c0_i32_6 = arith.constant 0 : i32
    %17 = vector.broadcast %c0_i32_6 : i32 to vector<16x64xi32>
    %18 = arith.addi %17, %16 : vector<16x64xi32>
    %c1_i32 = arith.constant 1 : i32
    %19 = vector.broadcast %c1_i32 : i32 to vector<16x64xi32>
    %20 = arith.addi %18, %19 : vector<16x64xi32>
    %21 = arith.cmpi eq, %5, %20 : vector<16x64xi32>
    %22 = arith.extui %21 : vector<16x64xi1> to vector<16x64xi32>
    %23 = arith.sitofp %22 : vector<16x64xi32> to vector<16x64xf32>
    %c2_i32_7 = arith.constant 2 : i32
    %24 = vector.broadcast %c2_i32_7 : i32 to vector<16x64xi32>
    %25 = arith.muli %24, %4 : vector<16x64xi32>
    %c32_i32 = arith.constant 32 : i32
    %26 = vector.broadcast %c32_i32 : i32 to vector<16x64xi32>
    %27 = arith.addi %26, %25 : vector<16x64xi32>
    %c0_i32_8 = arith.constant 0 : i32
    %28 = vector.broadcast %c0_i32_8 : i32 to vector<16x64xi32>
    %29 = arith.addi %27, %28 : vector<16x64xi32>
    %30 = arith.cmpi eq, %5, %29 : vector<16x64xi32>
    %31 = arith.extui %30 : vector<16x64xi1> to vector<16x64xi32>
    %32 = arith.sitofp %31 : vector<16x64xi32> to vector<16x64xf32>
    %c2_i32_9 = arith.constant 2 : i32
    %33 = vector.broadcast %c2_i32_9 : i32 to vector<16x64xi32>
    %34 = arith.muli %33, %4 : vector<16x64xi32>
    %c32_i32_10 = arith.constant 32 : i32
    %35 = vector.broadcast %c32_i32_10 : i32 to vector<16x64xi32>
    %36 = arith.addi %35, %34 : vector<16x64xi32>
    %c1_i32_11 = arith.constant 1 : i32
    %37 = vector.broadcast %c1_i32_11 : i32 to vector<16x64xi32>
    %38 = arith.addi %36, %37 : vector<16x64xi32>
    %39 = arith.cmpi eq, %5, %38 : vector<16x64xi32>
    %40 = arith.extui %39 : vector<16x64xi1> to vector<16x64xi32>
    %41 = arith.sitofp %40 : vector<16x64xi32> to vector<16x64xf32>
    %c0_12 = arith.constant 0 : index
    %c0_13 = arith.constant 0 : index
    %42 = vector.load %arg4[%c0_12, %c0_13] : memref<8x1xf32, #tpu.memory_space<vmem>>, vector<8x1xf32>
    %43 = vector.extract_strided_slice %3 {offsets = [0, 0], sizes = [32, 16], strides = [1, 1]} : vector<32x128xf32> to vector<32x16xf32>
    %44 = vector.extract_strided_slice %43 {offsets = [0, 0], sizes = [8, 16], strides = [1, 1]} : vector<32x16xf32> to vector<8x16xf32>
    %cst_14 = arith.constant dense<0.000000e+00> : vector<8x64xf32>
    %45 = tpu.matmul %44, %14, %cst_14 {dimension_numbers = #tpu.dot_dimension_numbers<[1], [0], [0], [1], [0, 0, 1, 1], [], []>} : vector<8x16xf32>, vector<16x64xf32>, vector<8x64xf32> -> vector<8x64xf32>
    %46 = vector.broadcast %42 : vector<8x1xf32> to vector<8x64xf32>
    %47 = arith.addf %46, %45 : vector<8x64xf32>
    %48 = vector.extract_strided_slice %43 {offsets = [8, 0], sizes = [8, 16], strides = [1, 1]} : vector<32x16xf32> to vector<8x16xf32>
    %cst_15 = arith.constant dense<0.000000e+00> : vector<8x64xf32>
    %49 = tpu.matmul %48, %23, %cst_15 {dimension_numbers = #tpu.dot_dimension_numbers<[1], [0], [0], [1], [0, 0, 1, 1], [], []>} : vector<8x16xf32>, vector<16x64xf32>, vector<8x64xf32> -> vector<8x64xf32>
    %50 = arith.addf %47, %49 : vector<8x64xf32>
    %51 = vector.extract_strided_slice %43 {offsets = [16, 0], sizes = [8, 16], strides = [1, 1]} : vector<32x16xf32> to vector<8x16xf32>
    %cst_16 = arith.constant dense<0.000000e+00> : vector<8x64xf32>
    %52 = tpu.matmul %51, %32, %cst_16 {dimension_numbers = #tpu.dot_dimension_numbers<[1], [0], [0], [1], [0, 0, 1, 1], [], []>} : vector<8x16xf32>, vector<16x64xf32>, vector<8x64xf32> -> vector<8x64xf32>
    %53 = arith.addf %50, %52 : vector<8x64xf32>
    %54 = vector.extract_strided_slice %43 {offsets = [24, 0], sizes = [8, 16], strides = [1, 1]} : vector<32x16xf32> to vector<8x16xf32>
    %cst_17 = arith.constant dense<0.000000e+00> : vector<8x64xf32>
    %55 = tpu.matmul %54, %41, %cst_17 {dimension_numbers = #tpu.dot_dimension_numbers<[1], [0], [0], [1], [0, 0, 1, 1], [], []>} : vector<8x16xf32>, vector<16x64xf32>, vector<8x64xf32> -> vector<8x64xf32>
    %56 = arith.addf %53, %55 : vector<8x64xf32>
    %57 = vector.shape_cast %56 : vector<8x64xf32> to vector<8x1x64xf32>
    %c0_18 = arith.constant 0 : index
    %c0_19 = arith.constant 0 : index
    %c0_20 = arith.constant 0 : index
    %c0_21 = arith.constant 0 : index
    %58 = vector.load %arg5[%c0_18, %c0_19, %c0_20, %c0_21] : memref<1x8x8x64xf32, #tpu.memory_space<vmem>>, vector<1x8x1x64xf32>
    %59 = vector.shape_cast %58 : vector<1x8x1x64xf32> to vector<8x1x64xf32>
    %60 = vector.shape_cast %57 : vector<8x1x64xf32> to vector<1x8x1x64xf32>
    tpu.vector_store %arg5[%c0_18, %c0_19, %c0_20, %c0_21], %60 {strides = array<i32>} : memref<1x8x8x64xf32, #tpu.memory_space<vmem>>, vector<1x8x1x64xf32>,
    %61 = vector.extract_strided_slice %3 {offsets = [0, 16], sizes = [32, 16], strides = [1, 1]} : vector<32x128xf32> to vector<32x16xf32>
    %62 = vector.extract_strided_slice %61 {offsets = [0, 0], sizes = [8, 16], strides = [1, 1]} : vector<32x16xf32> to vector<8x16xf32>
    %cst_22 = arith.constant dense<0.000000e+00> : vector<8x64xf32>
    %63 = tpu.matmul %62, %14, %cst_22 {dimension_numbers = #tpu.dot_dimension_numbers<[1], [0], [0], [1], [0, 0, 1, 1], [], []>} : vector<8x16xf32>, vector<16x64xf32>, vector<8x64xf32> -> vector<8x64xf32>
    %64 = vector.broadcast %42 : vector<8x1xf32> to vector<8x64xf32>
    %65 = arith.addf %64, %63 : vector<8x64xf32>
    %66 = vector.extract_strided_slice %61 {offsets = [8, 0], sizes = [8, 16], strides = [1, 1]} : vector<32x16xf32> to vector<8x16xf32>
    %cst_23 = arith.constant dense<0.000000e+00> : vector<8x64xf32>
    %67 = tpu.matmul %66, %23, %cst_23 {dimension_numbers = #tpu.dot_dimension_numbers<[1], [0], [0], [1], [0, 0, 1, 1], [], []>} : vector<8x16xf32>, vector<16x64xf32>, vector<8x64xf32> -> vector<8x64xf32>
    %68 = arith.addf %65, %67 : vector<8x64xf32>
    %69 = vector.extract_strided_slice %61 {offsets = [16, 0], sizes = [8, 16], strides = [1, 1]} : vector<32x16xf32> to vector<8x16xf32>
    %cst_24 = arith.constant dense<0.000000e+00> : vector<8x64xf32>
    %70 = tpu.matmul %69, %32, %cst_24 {dimension_numbers = #tpu.dot_dimension_numbers<[1], [0], [0], [1], [0, 0, 1, 1], [], []>} : vector<8x16xf32>, vector<16x64xf32>, vector<8x64xf32> -> vector<8x64xf32>
    %71 = arith.addf %68, %70 : vector<8x64xf32>
    %72 = vector.extract_strided_slice %61 {offsets = [24, 0], sizes = [8, 16], strides = [1, 1]} : vector<32x16xf32> to vector<8x16xf32>
    %cst_25 = arith.constant dense<0.000000e+00> : vector<8x64xf32>
    %73 = tpu.matmul %72, %41, %cst_25 {dimension_numbers = #tpu.dot_dimension_numbers<[1], [0], [0], [1], [0, 0, 1, 1], [], []>} : vector<8x16xf32>, vector<16x64xf32>, vector<8x64xf32> -> vector<8x64xf32>
    %74 = arith.addf %71, %73 : vector<8x64xf32>
    %75 = vector.shape_cast %74 : vector<8x64xf32> to vector<8x1x64xf32>
    %c0_26 = arith.constant 0 : index
    %c0_27 = arith.constant 0 : index
    %c1 = arith.constant 1 : index
    %c0_28 = arith.constant 0 : index
    %76 = vector.load %arg5[%c0_26, %c0_27, %c1, %c0_28] : memref<1x8x8x64xf32, #tpu.memory_space<vmem>>, vector<1x8x1x64xf32>
    %77 = vector.shape_cast %76 : vector<1x8x1x64xf32> to vector<8x1x64xf32>
    %78 = vector.shape_cast %75 : vector<8x1x64xf32> to vector<1x8x1x64xf32>
    tpu.vector_store %arg5[%c0_26, %c0_27, %c1, %c0_28], %78 {strides = array<i32>} : memref<1x8x8x64xf32, #tpu.memory_space<vmem>>, vector<1x8x1x64xf32>,
    %79 = vector.extract_strided_slice %3 {offsets = [0, 32], sizes = [32, 16], strides = [1, 1]} : vector<32x128xf32> to vector<32x16xf32>
    %80 = vector.extract_strided_slice %79 {offsets = [0, 0], sizes = [8, 16], strides = [1, 1]} : vector<32x16xf32> to vector<8x16xf32>
    %cst_29 = arith.constant dense<0.000000e+00> : vector<8x64xf32>
    %81 = tpu.matmul %80, %14, %cst_29 {dimension_numbers = #tpu.dot_dimension_numbers<[1], [0], [0], [1], [0, 0, 1, 1], [], []>} : vector<8x16xf32>, vector<16x64xf32>, vector<8x64xf32> -> vector<8x64xf32>
    %82 = vector.broadcast %42 : vector<8x1xf32> to vector<8x64xf32>
    %83 = arith.addf %82, %81 : vector<8x64xf32>
    %84 = vector.extract_strided_slice %79 {offsets = [8, 0], sizes = [8, 16], strides = [1, 1]} : vector<32x16xf32> to vector<8x16xf32>
    %cst_30 = arith.constant dense<0.000000e+00> : vector<8x64xf32>
    %85 = tpu.matmul %84, %23, %cst_30 {dimension_numbers = #tpu.dot_dimension_numbers<[1], [0], [0], [1], [0, 0, 1, 1], [], []>} : vector<8x16xf32>, vector<16x64xf32>, vector<8x64xf32> -> vector<8x64xf32>
    %86 = arith.addf %83, %85 : vector<8x64xf32>
    %87 = vector.extract_strided_slice %79 {offsets = [16, 0], sizes = [8, 16], strides = [1, 1]} : vector<32x16xf32> to vector<8x16xf32>
    %cst_31 = arith.constant dense<0.000000e+00> : vector<8x64xf32>
    %88 = tpu.matmul %87, %32, %cst_31 {dimension_numbers = #tpu.dot_dimension_numbers<[1], [0], [0], [1], [0, 0, 1, 1], [], []>} : vector<8x16xf32>, vector<16x64xf32>, vector<8x64xf32> -> vector<8x64xf32>
    %89 = arith.addf %86, %88 : vector<8x64xf32>
    %90 = vector.extract_strided_slice %79 {offsets = [24, 0], sizes = [8, 16], strides = [1, 1]} : vector<32x16xf32> to vector<8x16xf32>
    %cst_32 = arith.constant dense<0.000000e+00> : vector<8x64xf32>
    %91 = tpu.matmul %90, %41, %cst_32 {dimension_numbers = #tpu.dot_dimension_numbers<[1], [0], [0], [1], [0, 0, 1, 1], [], []>} : vector<8x16xf32>, vector<16x64xf32>, vector<8x64xf32> -> vector<8x64xf32>
    %92 = arith.addf %89, %91 : vector<8x64xf32>
    %93 = vector.shape_cast %92 : vector<8x64xf32> to vector<8x1x64xf32>
    %c0_33 = arith.constant 0 : index
    %c0_34 = arith.constant 0 : index
    %c2 = arith.constant 2 : index
    %c0_35 = arith.constant 0 : index
    %94 = vector.load %arg5[%c0_33, %c0_34, %c2, %c0_35] : memref<1x8x8x64xf32, #tpu.memory_space<vmem>>, vector<1x8x1x64xf32>
    %95 = vector.shape_cast %94 : vector<1x8x1x64xf32> to vector<8x1x64xf32>
    %96 = vector.shape_cast %93 : vector<8x1x64xf32> to vector<1x8x1x64xf32>
    tpu.vector_store %arg5[%c0_33, %c0_34, %c2, %c0_35], %96 {strides = array<i32>} : memref<1x8x8x64xf32, #tpu.memory_space<vmem>>, vector<1x8x1x64xf32>,
    %97 = vector.extract_strided_slice %3 {offsets = [0, 48], sizes = [32, 16], strides = [1, 1]} : vector<32x128xf32> to vector<32x16xf32>
    %98 = vector.extract_strided_slice %97 {offsets = [0, 0], sizes = [8, 16], strides = [1, 1]} : vector<32x16xf32> to vector<8x16xf32>
    %cst_36 = arith.constant dense<0.000000e+00> : vector<8x64xf32>
    %99 = tpu.matmul %98, %14, %cst_36 {dimension_numbers = #tpu.dot_dimension_numbers<[1], [0], [0], [1], [0, 0, 1, 1], [], []>} : vector<8x16xf32>, vector<16x64xf32>, vector<8x64xf32> -> vector<8x64xf32>
    %100 = vector.broadcast %42 : vector<8x1xf32> to vector<8x64xf32>
    %101 = arith.addf %100, %99 : vector<8x64xf32>
    %102 = vector.extract_strided_slice %97 {offsets = [8, 0], sizes = [8, 16], strides = [1, 1]} : vector<32x16xf32> to vector<8x16xf32>
    %cst_37 = arith.constant dense<0.000000e+00> : vector<8x64xf32>
    %103 = tpu.matmul %102, %23, %cst_37 {dimension_numbers = #tpu.dot_dimension_numbers<[1], [0], [0], [1], [0, 0, 1, 1], [], []>} : vector<8x16xf32>, vector<16x64xf32>, vector<8x64xf32> -> vector<8x64xf32>
    %104 = arith.addf %101, %103 : vector<8x64xf32>
    %105 = vector.extract_strided_slice %97 {offsets = [16, 0], sizes = [8, 16], strides = [1, 1]} : vector<32x16xf32> to vector<8x16xf32>
    %cst_38 = arith.constant dense<0.000000e+00> : vector<8x64xf32>
    %106 = tpu.matmul %105, %32, %cst_38 {dimension_numbers = #tpu.dot_dimension_numbers<[1], [0], [0], [1], [0, 0, 1, 1], [], []>} : vector<8x16xf32>, vector<16x64xf32>, vector<8x64xf32> -> vector<8x64xf32>
    %107 = arith.addf %104, %106 : vector<8x64xf32>
    %108 = vector.extract_strided_slice %97 {offsets = [24, 0], sizes = [8, 16], strides = [1, 1]} : vector<32x16xf32> to vector<8x16xf32>
    %cst_39 = arith.constant dense<0.000000e+00> : vector<8x64xf32>
    %109 = tpu.matmul %108, %41, %cst_39 {dimension_numbers = #tpu.dot_dimension_numbers<[1], [0], [0], [1], [0, 0, 1, 1], [], []>} : vector<8x16xf32>, vector<16x64xf32>, vector<8x64xf32> -> vector<8x64xf32>
    %110 = arith.addf %107, %109 : vector<8x64xf32>
    %111 = vector.shape_cast %110 : vector<8x64xf32> to vector<8x1x64xf32>
    %c0_40 = arith.constant 0 : index
    %c0_41 = arith.constant 0 : index
    %c3 = arith.constant 3 : index
    %c0_42 = arith.constant 0 : index
    %112 = vector.load %arg5[%c0_40, %c0_41, %c3, %c0_42] : memref<1x8x8x64xf32, #tpu.memory_space<vmem>>, vector<1x8x1x64xf32>
    %113 = vector.shape_cast %112 : vector<1x8x1x64xf32> to vector<8x1x64xf32>
    %114 = vector.shape_cast %111 : vector<8x1x64xf32> to vector<1x8x1x64xf32>
    tpu.vector_store %arg5[%c0_40, %c0_41, %c3, %c0_42], %114 {strides = array<i32>} : memref<1x8x8x64xf32, #tpu.memory_space<vmem>>, vector<1x8x1x64xf32>,
    %115 = vector.extract_strided_slice %3 {offsets = [0, 64], sizes = [32, 16], strides = [1, 1]} : vector<32x128xf32> to vector<32x16xf32>
    %116 = vector.extract_strided_slice %115 {offsets = [0, 0], sizes = [8, 16], strides = [1, 1]} : vector<32x16xf32> to vector<8x16xf32>
    %cst_43 = arith.constant dense<0.000000e+00> : vector<8x64xf32>
    %117 = tpu.matmul %116, %14, %cst_43 {dimension_numbers = #tpu.dot_dimension_numbers<[1], [0], [0], [1], [0, 0, 1, 1], [], []>} : vector<8x16xf32>, vector<16x64xf32>, vector<8x64xf32> -> vector<8x64xf32>
    %118 = vector.broadcast %42 : vector<8x1xf32> to vector<8x64xf32>
    %119 = arith.addf %118, %117 : vector<8x64xf32>
    %120 = vector.extract_strided_slice %115 {offsets = [8, 0], sizes = [8, 16], strides = [1, 1]} : vector<32x16xf32> to vector<8x16xf32>
    %cst_44 = arith.constant dense<0.000000e+00> : vector<8x64xf32>
    %121 = tpu.matmul %120, %23, %cst_44 {dimension_numbers = #tpu.dot_dimension_numbers<[1], [0], [0], [1], [0, 0, 1, 1], [], []>} : vector<8x16xf32>, vector<16x64xf32>, vector<8x64xf32> -> vector<8x64xf32>
    %122 = arith.addf %119, %121 : vector<8x64xf32>
    %123 = vector.extract_strided_slice %115 {offsets = [16, 0], sizes = [8, 16], strides = [1, 1]} : vector<32x16xf32> to vector<8x16xf32>
    %cst_45 = arith.constant dense<0.000000e+00> : vector<8x64xf32>
    %124 = tpu.matmul %123, %32, %cst_45 {dimension_numbers = #tpu.dot_dimension_numbers<[1], [0], [0], [1], [0, 0, 1, 1], [], []>} : vector<8x16xf32>, vector<16x64xf32>, vector<8x64xf32> -> vector<8x64xf32>
    %125 = arith.addf %122, %124 : vector<8x64xf32>
    %126 = vector.extract_strided_slice %115 {offsets = [24, 0], sizes = [8, 16], strides = [1, 1]} : vector<32x16xf32> to vector<8x16xf32>
    %cst_46 = arith.constant dense<0.000000e+00> : vector<8x64xf32>
    %127 = tpu.matmul %126, %41, %cst_46 {dimension_numbers = #tpu.dot_dimension_numbers<[1], [0], [0], [1], [0, 0, 1, 1], [], []>} : vector<8x16xf32>, vector<16x64xf32>, vector<8x64xf32> -> vector<8x64xf32>
    %128 = arith.addf %125, %127 : vector<8x64xf32>
    %129 = vector.shape_cast %128 : vector<8x64xf32> to vector<8x1x64xf32>
    %c0_47 = arith.constant 0 : index
    %c0_48 = arith.constant 0 : index
    %c4 = arith.constant 4 : index
    %c0_49 = arith.constant 0 : index
    %130 = vector.load %arg5[%c0_47, %c0_48, %c4, %c0_49] : memref<1x8x8x64xf32, #tpu.memory_space<vmem>>, vector<1x8x1x64xf32>
    %131 = vector.shape_cast %130 : vector<1x8x1x64xf32> to vector<8x1x64xf32>
    %132 = vector.shape_cast %129 : vector<8x1x64xf32> to vector<1x8x1x64xf32>
    tpu.vector_store %arg5[%c0_47, %c0_48, %c4, %c0_49], %132 {strides = array<i32>} : memref<1x8x8x64xf32, #tpu.memory_space<vmem>>, vector<1x8x1x64xf32>,
    %133 = vector.extract_strided_slice %3 {offsets = [0, 80], sizes = [32, 16], strides = [1, 1]} : vector<32x128xf32> to vector<32x16xf32>
    %134 = vector.extract_strided_slice %133 {offsets = [0, 0], sizes = [8, 16], strides = [1, 1]} : vector<32x16xf32> to vector<8x16xf32>
    %cst_50 = arith.constant dense<0.000000e+00> : vector<8x64xf32>
    %135 = tpu.matmul %134, %14, %cst_50 {dimension_numbers = #tpu.dot_dimension_numbers<[1], [0], [0], [1], [0, 0, 1, 1], [], []>} : vector<8x16xf32>, vector<16x64xf32>, vector<8x64xf32> -> vector<8x64xf32>
    %136 = vector.broadcast %42 : vector<8x1xf32> to vector<8x64xf32>
    %137 = arith.addf %136, %135 : vector<8x64xf32>
    %138 = vector.extract_strided_slice %133 {offsets = [8, 0], sizes = [8, 16], strides = [1, 1]} : vector<32x16xf32> to vector<8x16xf32>
    %cst_51 = arith.constant dense<0.000000e+00> : vector<8x64xf32>
    %139 = tpu.matmul %138, %23, %cst_51 {dimension_numbers = #tpu.dot_dimension_numbers<[1], [0], [0], [1], [0, 0, 1, 1], [], []>} : vector<8x16xf32>, vector<16x64xf32>, vector<8x64xf32> -> vector<8x64xf32>
    %140 = arith.addf %137, %139 : vector<8x64xf32>
    %141 = vector.extract_strided_slice %133 {offsets = [16, 0], sizes = [8, 16], strides = [1, 1]} : vector<32x16xf32> to vector<8x16xf32>
    %cst_52 = arith.constant dense<0.000000e+00> : vector<8x64xf32>
    %142 = tpu.matmul %141, %32, %cst_52 {dimension_numbers = #tpu.dot_dimension_numbers<[1], [0], [0], [1], [0, 0, 1, 1], [], []>} : vector<8x16xf32>, vector<16x64xf32>, vector<8x64xf32> -> vector<8x64xf32>
    %143 = arith.addf %140, %142 : vector<8x64xf32>
    %144 = vector.extract_strided_slice %133 {offsets = [24, 0], sizes = [8, 16], strides = [1, 1]} : vector<32x16xf32> to vector<8x16xf32>
    %cst_53 = arith.constant dense<0.000000e+00> : vector<8x64xf32>
    %145 = tpu.matmul %144, %41, %cst_53 {dimension_numbers = #tpu.dot_dimension_numbers<[1], [0], [0], [1], [0, 0, 1, 1], [], []>} : vector<8x16xf32>, vector<16x64xf32>, vector<8x64xf32> -> vector<8x64xf32>
    %146 = arith.addf %143, %145 : vector<8x64xf32>
    %147 = vector.shape_cast %146 : vector<8x64xf32> to vector<8x1x64xf32>
    %c0_54 = arith.constant 0 : index
    %c0_55 = arith.constant 0 : index
    %c5 = arith.constant 5 : index
    %c0_56 = arith.constant 0 : index
    %148 = vector.load %arg5[%c0_54, %c0_55, %c5, %c0_56] : memref<1x8x8x64xf32, #tpu.memory_space<vmem>>, vector<1x8x1x64xf32>
    %149 = vector.shape_cast %148 : vector<1x8x1x64xf32> to vector<8x1x64xf32>
    %150 = vector.shape_cast %147 : vector<8x1x64xf32> to vector<1x8x1x64xf32>
    tpu.vector_store %arg5[%c0_54, %c0_55, %c5, %c0_56], %150 {strides = array<i32>} : memref<1x8x8x64xf32, #tpu.memory_space<vmem>>, vector<1x8x1x64xf32>,
    %151 = vector.extract_strided_slice %3 {offsets = [0, 96], sizes = [32, 16], strides = [1, 1]} : vector<32x128xf32> to vector<32x16xf32>
    %152 = vector.extract_strided_slice %151 {offsets = [0, 0], sizes = [8, 16], strides = [1, 1]} : vector<32x16xf32> to vector<8x16xf32>
    %cst_57 = arith.constant dense<0.000000e+00> : vector<8x64xf32>
    %153 = tpu.matmul %152, %14, %cst_57 {dimension_numbers = #tpu.dot_dimension_numbers<[1], [0], [0], [1], [0, 0, 1, 1], [], []>} : vector<8x16xf32>, vector<16x64xf32>, vector<8x64xf32> -> vector<8x64xf32>
    %154 = vector.broadcast %42 : vector<8x1xf32> to vector<8x64xf32>
    %155 = arith.addf %154, %153 : vector<8x64xf32>
    %156 = vector.extract_strided_slice %151 {offsets = [8, 0], sizes = [8, 16], strides = [1, 1]} : vector<32x16xf32> to vector<8x16xf32>
    %cst_58 = arith.constant dense<0.000000e+00> : vector<8x64xf32>
    %157 = tpu.matmul %156, %23, %cst_58 {dimension_numbers = #tpu.dot_dimension_numbers<[1], [0], [0], [1], [0, 0, 1, 1], [], []>} : vector<8x16xf32>, vector<16x64xf32>, vector<8x64xf32> -> vector<8x64xf32>
    %158 = arith.addf %155, %157 : vector<8x64xf32>
    %159 = vector.extract_strided_slice %151 {offsets = [16, 0], sizes = [8, 16], strides = [1, 1]} : vector<32x16xf32> to vector<8x16xf32>
    %cst_59 = arith.constant dense<0.000000e+00> : vector<8x64xf32>
    %160 = tpu.matmul %159, %32, %cst_59 {dimension_numbers = #tpu.dot_dimension_numbers<[1], [0], [0], [1], [0, 0, 1, 1], [], []>} : vector<8x16xf32>, vector<16x64xf32>, vector<8x64xf32> -> vector<8x64xf32>
    %161 = arith.addf %158, %160 : vector<8x64xf32>
    %162 = vector.extract_strided_slice %151 {offsets = [24, 0], sizes = [8, 16], strides = [1, 1]} : vector<32x16xf32> to vector<8x16xf32>
    %cst_60 = arith.constant dense<0.000000e+00> : vector<8x64xf32>
    %163 = tpu.matmul %162, %41, %cst_60 {dimension_numbers = #tpu.dot_dimension_numbers<[1], [0], [0], [1], [0, 0, 1, 1], [], []>} : vector<8x16xf32>, vector<16x64xf32>, vector<8x64xf32> -> vector<8x64xf32>
    %164 = arith.addf %161, %163 : vector<8x64xf32>
    %165 = vector.shape_cast %164 : vector<8x64xf32> to vector<8x1x64xf32>
    %c0_61 = arith.constant 0 : index
    %c0_62 = arith.constant 0 : index
    %c6 = arith.constant 6 : index
    %c0_63 = arith.constant 0 : index
    %166 = vector.load %arg5[%c0_61, %c0_62, %c6, %c0_63] : memref<1x8x8x64xf32, #tpu.memory_space<vmem>>, vector<1x8x1x64xf32>
    %167 = vector.shape_cast %166 : vector<1x8x1x64xf32> to vector<8x1x64xf32>
    %168 = vector.shape_cast %165 : vector<8x1x64xf32> to vector<1x8x1x64xf32>
    tpu.vector_store %arg5[%c0_61, %c0_62, %c6, %c0_63], %168 {strides = array<i32>} : memref<1x8x8x64xf32, #tpu.memory_space<vmem>>, vector<1x8x1x64xf32>,
    %169 = vector.extract_strided_slice %3 {offsets = [0, 112], sizes = [32, 16], strides = [1, 1]} : vector<32x128xf32> to vector<32x16xf32>
    %170 = vector.extract_strided_slice %169 {offsets = [0, 0], sizes = [8, 16], strides = [1, 1]} : vector<32x16xf32> to vector<8x16xf32>
    %cst_64 = arith.constant dense<0.000000e+00> : vector<8x64xf32>
    %171 = tpu.matmul %170, %14, %cst_64 {dimension_numbers = #tpu.dot_dimension_numbers<[1], [0], [0], [1], [0, 0, 1, 1], [], []>} : vector<8x16xf32>, vector<16x64xf32>, vector<8x64xf32> -> vector<8x64xf32>
    %172 = vector.broadcast %42 : vector<8x1xf32> to vector<8x64xf32>
    %173 = arith.addf %172, %171 : vector<8x64xf32>
    %174 = vector.extract_strided_slice %169 {offsets = [8, 0], sizes = [8, 16], strides = [1, 1]} : vector<32x16xf32> to vector<8x16xf32>
    %cst_65 = arith.constant dense<0.000000e+00> : vector<8x64xf32>
    %175 = tpu.matmul %174, %23, %cst_65 {dimension_numbers = #tpu.dot_dimension_numbers<[1], [0], [0], [1], [0, 0, 1, 1], [], []>} : vector<8x16xf32>, vector<16x64xf32>, vector<8x64xf32> -> vector<8x64xf32>
    %176 = arith.addf %173, %175 : vector<8x64xf32>
    %177 = vector.extract_strided_slice %169 {offsets = [16, 0], sizes = [8, 16], strides = [1, 1]} : vector<32x16xf32> to vector<8x16xf32>
    %cst_66 = arith.constant dense<0.000000e+00> : vector<8x64xf32>
    %178 = tpu.matmul %177, %32, %cst_66 {dimension_numbers = #tpu.dot_dimension_numbers<[1], [0], [0], [1], [0, 0, 1, 1], [], []>} : vector<8x16xf32>, vector<16x64xf32>, vector<8x64xf32> -> vector<8x64xf32>
    %179 = arith.addf %176, %178 : vector<8x64xf32>
    %180 = vector.extract_strided_slice %169 {offsets = [24, 0], sizes = [8, 16], strides = [1, 1]} : vector<32x16xf32> to vector<8x16xf32>
    %cst_67 = arith.constant dense<0.000000e+00> : vector<8x64xf32>
    %181 = tpu.matmul %180, %41, %cst_67 {dimension_numbers = #tpu.dot_dimension_numbers<[1], [0], [0], [1], [0, 0, 1, 1], [], []>} : vector<8x16xf32>, vector<16x64xf32>, vector<8x64xf32> -> vector<8x64xf32>
    %182 = arith.addf %179, %181 : vector<8x64xf32>
    %183 = vector.shape_cast %182 : vector<8x64xf32> to vector<8x1x64xf32>
    %c0_68 = arith.constant 0 : index
    %c0_69 = arith.constant 0 : index
    %c7 = arith.constant 7 : index
    %c0_70 = arith.constant 0 : index
    %184 = vector.load %arg5[%c0_68, %c0_69, %c7, %c0_70] : memref<1x8x8x64xf32, #tpu.memory_space<vmem>>, vector<1x8x1x64xf32>
    %185 = vector.shape_cast %184 : vector<1x8x1x64xf32> to vector<8x1x64xf32>
    %186 = vector.shape_cast %183 : vector<8x1x64xf32> to vector<1x8x1x64xf32>
    tpu.vector_store %arg5[%c0_68, %c0_69, %c7, %c0_70], %186 {strides = array<i32>} : memref<1x8x8x64xf32, #tpu.memory_space<vmem>>, vector<1x8x1x64xf32>,
    return
  }
  func.func @transform_0(%arg0: i32, %arg1: i32) -> (i32, i32, i32) {
    %c0_i32 = arith.constant 0 : i32
    %c0_i32_0 = arith.constant 0 : i32
    return %arg0, %c0_i32, %arg1 : i32, i32, i32
  }
  func.func @transform_1(%arg0: i32, %arg1: i32) -> (i32, i32) {
    %c0_i32 = arith.constant 0 : i32
    %c0_i32_0 = arith.constant 0 : i32
    %c0_i32_1 = arith.constant 0 : i32
    return %c0_i32, %c0_i32_0 : i32, i32
  }
  func.func @transform_2(%arg0: i32, %arg1: i32) -> (i32, i32) {
    %c0_i32 = arith.constant 0 : i32
    %c0_i32_0 = arith.constant 0 : i32
    %c0_i32_1 = arith.constant 0 : i32
    return %c0_i32, %c0_i32_0 : i32, i32
  }
  func.func @transform_3(%arg0: i32, %arg1: i32) -> (i32, i32, i32, i32) {
    %c0_i32 = arith.constant 0 : i32
    %c0_i32_0 = arith.constant 0 : i32
    %c0_i32_1 = arith.constant 0 : i32
    return %arg0, %c0_i32, %arg1, %c0_i32_0 : i32, i32, i32, i32
  }
}

</mosaic_0001>

<llo_original>
// kernel: upsample_forward.1
$region0: #{upsample_forward.1}
  #allocation0 [shape = 'u32[]', space=smem, size = 0x4, offset = 0x4, fixed_abs, tag = 'smem constant byte address 0x4 - core index']
  #allocation1 [shape = 'u32[72,128]{1,0:T(1,128)}', space=vmem, size = 0x9000, scoped, tag = 'internal scratch']
  %s0 = inlined_call_operand.vmem [shape: f32[2,4,256], index: 0, kind: input, shape index: {}]
  %s1 = inlined_call_operand.vmem [shape: f32[32,4], index: 1, kind: input, shape index: {}]
  %s2 = inlined_call_operand.vmem [shape: f32[8,1], index: 2, kind: input, shape index: {}]
  %s3 = inlined_call_operand.vmem [shape: f32[2,8,16,64], index: 3, kind: output, shape index: {}]
  %s4 = sld [smem:[#allocation0]]
  $region79: #{upsample_forward.1} parent=0
    _
  %s6 = ssub.s32 1, %s4
  %s7 = scalar_select 0, %s6, %s4
  $region1: #{upsample_forward.1} parent=0
    #allocation2 [shape = 'u8[65536]{0}', space=vmem, size = 0x10000, scoped, tag = 'output window, operand 0']
    loop: start=0, step=1, limit=6
    $region2: #{upsample_forward.1} parent=1 // loop_pre_header
      _
    $region3: #{upsample_forward.1} parent=1 // loop_header
      %s9 = sphi 0, %s13
      %p10 = scmp.ge.s32.totalorder %s9, 6
      %s16 = sphi 0, %s28
      %s17 = sphi 0, %s24
      %s18 = sphi 0, %s16
      %s19 = sphi 0, %s17
      %s20 = sphi 0, %s18
      %s21 = sphi 0, %s19
      %s33 = sphi 0, %s35
      %s36 = sphi 0, %s33
      %s37 = sphi 0, %s36
      %s53 = sphi 0, %s37
      %s57 = sphi 0, %s57
      %s59 = sphi 0, %s57
      %s60 = sphi 0, %s59
      %s74 = sphi 0, %s60
      %s78 = sphi 0, %s78
      %s80 = sphi 0, %s78
      %s81 = sphi 0, %s80
      %s95 = sphi 0, %s81
      %s103 = sphi 0, %s105
      %s106 = sphi 0, %s103
      %s107 = sphi 0, %s106
      %s123 = sphi 0, %s107
    $region4: #{upsample_forward.1} parent=1 // loop_header_branch
      %12 = sbr.rel (%p10) target = $region8
    $region5: #{upsample_forward.1} parent=1 // loop_body
      %s14 = ssub.s32 %s9, 1
      %s15 = ssub.s32 %s9, 2
      %s22 = sadd.s32 1, %s17
      %p23 = scmp.ge.s32.totalorder %s22, 2
      %s24 = scalar_select %p23, 0, %s22
      %s25 = sadd.s32 1, %s16
      %s26 = scalar_select %p23, %s25, %s16
      %p27 = scmp.ge.s32.totalorder %s26, 2
      %s28 = scalar_select %p27, 0, %s26
      %s29 = ssub.s32 %s16, %s28
      %s30 = ssub.s32 %s17, %s24
      %s31 = sor.u32 %s29, %s30
      %p32 = scmp.eq.s32.totalorder %s31, 0
      %s34 = sadd.s32 %s33, 1
      %s35 = scalar_select %p32, %s33, %s34
      %p38 = pneg %p32
      %p39 = scmp.eq.s32.totalorder %s9, 3
      %p40 = por %p38, %p39
      %p41 = scmp.ne.s32.totalorder %s33, %s36
      %p42 = scmp.eq.s32.totalorder %s9, 0
      %p43 = por %p41, %p42
      %p44 = scmp.ne.s32.totalorder %s33, %s36
      %p45 = scmp.eq.s32.totalorder %s14, 3
      %p46 = por %p44, %p45
      %p47 = scmp.ne.s32.totalorder %s36, %s37
      %p48 = scmp.eq.s32.totalorder %s14, 0
      %p49 = por %p47, %p48
      %p50 = scmp.ne.s32.totalorder %s36, %s37
      %p51 = scmp.eq.s32.totalorder %s15, 3
      %p52 = por %p50, %p51
      %p54 = scmp.ne.s32.totalorder %s37, %s53
      %p55 = scmp.eq.s32.totalorder %s15, 0
      %p56 = por %p54, %p55
      %s58 = sadd.s32 %s57, 1
      %p61 = scmp.eq.s32.totalorder %s9, 3
      %p62 = scmp.ne.s32.totalorder %s57, %s59
      %p63 = scmp.eq.s32.totalorder %s9, 0
      %p64 = por %p62, %p63
      %p65 = scmp.ne.s32.totalorder %s57, %s59
      %p66 = scmp.eq.s32.totalorder %s14, 3
      %p67 = por %p65, %p66
      %p68 = scmp.ne.s32.totalorder %s59, %s60
      %p69 = scmp.eq.s32.totalorder %s14, 0
      %p70 = por %p68, %p69
      %p71 = scmp.ne.s32.totalorder %s59, %s60
      %p72 = scmp.eq.s32.totalorder %s15, 3
      %p73 = por %p71, %p72
      %p75 = scmp.ne.s32.totalorder %s60, %s74
      %p76 = scmp.eq.s32.totalorder %s15, 0
      %p77 = por %p75, %p76
      %s79 = sadd.s32 %s78, 1
      %p82 = scmp.eq.s32.totalorder %s9, 3
      %p83 = scmp.ne.s32.totalorder %s78, %s80
      %p84 = scmp.eq.s32.totalorder %s9, 0
      %p85 = por %p83, %p84
      %p86 = scmp.ne.s32.totalorder %s78, %s80
      %p87 = scmp.eq.s32.totalorder %s14, 3
      %p88 = por %p86, %p87
      %p89 = scmp.ne.s32.totalorder %s80, %s81
      %p90 = scmp.eq.s32.totalorder %s14, 0
      %p91 = por %p89, %p90
      %p92 = scmp.ne.s32.totalorder %s80, %s81
      %p93 = scmp.eq.s32.totalorder %s15, 3
      %p94 = por %p92, %p93
      %p96 = scmp.ne.s32.totalorder %s81, %s95
      %p97 = scmp.eq.s32.totalorder %s15, 0
      %p98 = por %p96, %p97
      %s99 = ssub.s32 %s16, %s28
      %s100 = ssub.s32 %s17, %s24
      %s101 = sor.u32 %s99, %s100
      %p102 = scmp.eq.s32.totalorder %s101, 0
      %s104 = sadd.s32 %s103, 1
      %s105 = scalar_select %p102, %s103, %s104
      %p108 = pneg %p102
      %p109 = scmp.eq.s32.totalorder %s9, 3
      %p110 = por %p108, %p109
      %p111 = scmp.ne.s32.totalorder %s103, %s106
      %p112 = scmp.eq.s32.totalorder %s9, 0
      %p113 = por %p111, %p112
      %p114 = scmp.ne.s32.totalorder %s103, %s106
      %p115 = scmp.eq.s32.totalorder %s14, 3
      %p116 = por %p114, %p115
      %p117 = scmp.ne.s32.totalorder %s106, %s107
      %p118 = scmp.eq.s32.totalorder %s14, 0
      %p119 = por %p117, %p118
      %p120 = scmp.ne.s32.totalorder %s106, %s107
      %p121 = scmp.eq.s32.totalorder %s15, 3
      %p122 = por %p120, %p121
      %p124 = scmp.ne.s32.totalorder %s107, %s123
      %p125 = scmp.eq.s32.totalorder %s15, 0
      %p126 = por %p124, %p125
      %p127 = scmp.le.s32.totalorder 1, %s9
      %p128 = scmp.lt.s32.totalorder %s9, 5
      %p129 = pnand %p127, %p128
      %p130 = pneg %p129
      // Predicated region
      $region9: #{upsample_forward.1} parent=5 // pred_check
        _
      $region10: #{upsample_forward.1} parent=5 // pred_check_branch
        %132 = sbr.rel (%p129) target = $region12
      $region11: #{upsample_forward.1} parent=5 // pred_region
        %s133 = ssub.s32 %s9, 1
        // Predicated region
        $region13: #{upsample_forward.1} parent=11 // pred_check
          %p134 = pneg %p70
        $region14: #{upsample_forward.1} parent=11 // pred_check_branch
          %136 = sbr.rel (%p134) target = $region16
        $region15: #{upsample_forward.1} parent=11 // pred_region
          _
        $region16: #{upsample_forward.1} parent=11 // pred_fallthru
          _
        // Predicated region
        $region17: #{upsample_forward.1} parent=11 // pred_check
          %p137 = pneg %p91
        $region18: #{upsample_forward.1} parent=11 // pred_check_branch
          %139 = sbr.rel (%p137) target = $region20
        $region19: #{upsample_forward.1} parent=11 // pred_region
          _
        $region20: #{upsample_forward.1} parent=11 // pred_fallthru
          _
      $region12: #{upsample_forward.1} parent=5 // pred_fallthru
        _
      %p140 = scmp.lt.s32.totalorder %s9, 4
      // Predicated region
      $region21: #{upsample_forward.1} parent=5 // pred_check
        %p141 = pneg %p140
      $region22: #{upsample_forward.1} parent=5 // pred_check_branch
        %143 = sbr.rel (%p141) target = $region24
      $region23: #{upsample_forward.1} parent=5 // pred_region
        // Predicated region
        $region25: #{upsample_forward.1} parent=23 // pred_check
          %p144 = pneg %p43
        $region26: #{upsample_forward.1} parent=23 // pred_check_branch
          %146 = sbr.rel (%p144) target = $region28
        $region27: #{upsample_forward.1} parent=23 // pred_region
          %p147 = scmp.lt.s32.totalorder %s16, 1
          %s148 = scalar_select %p147, %s16, 1
          %p149 = scmp.lt.s32.totalorder %s17, 1
          %s150 = scalar_select %p149, %s17, 1
          %s151 = smul.addr %s148, 2
          %s152 = sadd.s32 %s150, %s151
          %s153 = smul.addr %s152, 4
          %s154 = scalar_lea.vmem %s0, %s153
        $region28: #{upsample_forward.1} parent=23 // pred_fallthru
          _
      $region24: #{upsample_forward.1} parent=5 // pred_fallthru
        _
      %p155 = scmp.le.s32.totalorder 1, %s9
      %p156 = scmp.lt.s32.totalorder %s9, 5
      %p157 = pnand %p155, %p156
      %p158 = pneg %p157
      // Predicated region
      $region29: #{upsample_forward.1} parent=5 // pred_check
        _
      $region30: #{upsample_forward.1} parent=5 // pred_check_branch
        %160 = sbr.rel (%p157) target = $region32
      $region31: #{upsample_forward.1} parent=5 // pred_region
        %s161 = ssub.s32 %s9, 1
        %p162 = scmp.lt.s32.totalorder %s18, 1
        %s163 = scalar_select %p162, %s18, 1
        %p164 = scmp.lt.s32.totalorder %s19, 1
        %s165 = scalar_select %p164, %s19, 1
        %s166 = smul.addr %s163, 2
        %s167 = sadd.s32 %s165, %s166
        %s168 = smul.addr %s167, 4
        %s169 = scalar_lea.vmem %s0, %s168
        %p170 = pneg %p49
        %p171 = pneg %p46
        %p172 = pneg %p70
        %p173 = pneg %p67
        %p174 = pneg %p91
        %p175 = pneg %p88
        %p176 = pneg %p119
        %p177 = pneg %p116
        %s178 = sand.u32 %s106, 1
        %s179 = sand.u32 %s106, 1
        %s180 = smul.addr %s179, 64
        %s181 = scalar_lea.vmem [#allocation2], %s180
        %p182 = scmp.lt.s32.totalorder %s18, 1
        %s183 = scalar_select %p182, %s18, 1
        %p184 = scmp.lt.s32.totalorder %s19, 1
        %s185 = scalar_select %p184, %s19, 1
        %s186 = smul.addr %s183, 2
        %s187 = sadd.s32 %s185, %s186
        %s188 = smul.addr %s187, 4
        %s189 = scalar_lea.vmem %s0, %s188
        %v190 = vld [vmem:[%s189] sm:$0xf]
        %v191 = vld [vmem:[%s1] sm:$0xff]
        %v192 = vld [vmem:[%s1 + $0x8] sm:$0xff]
        %v193 = vld [vmem:[%s1 + $0x10] sm:$0xff]
        %v194 = vld [vmem:[%s1 + $0x18] sm:$0xff]
        %vm195 = vcmask 31744
        %v197 = vsel %vm195, %v191, 0
        %v200 = vsel %vm195, %v192, 0
        %v203 = vsel %vm195, %v193, 0
        %v206 = vsel %vm195, %v194, 0
        %vm208 = vcmask 1043456
        %v210 = vsel %vm208, %v190, 0
        %212 = vmatpush.msra.mxu0 0.0
        %213 = vmatpush.msra.mxu0 0.0
        %214 = vmatpush.msra.mxu0 0.0
        %215 = vmatpush.msra.mxu0 0.0
        %216 = vmatpush.msra.mxu0 0.0
        %217 = vmatpush.msra.mxu0 0.0
        %218 = vmatpush.msra.mxu0 0.0
        %219 = vmatpush.msra.mxu0 0.0
        %220 = vmatpush.msra.mxu0 0.0
        %221 = vmatpush.msra.mxu0 0.0
        %222 = vmatpush.msra.mxu0 0.0
        %223 = vmatpush.msra.mxu0 0.0
        %224 = vmatpush.msra.mxu0 0.0
        %225 = vmatpush.msra.mxu0 0.0
        %226 = vmatpush.msra.mxu0 0.0
        %227 = vmatpush.msra.mxu0 %v210
        %228 = vmatmul.f32.gmra.mxu0 %v197
        %v229 = vpop.f32.mrf.mxu0
        %v230 = vadd.f32 0.0, %v229
        %231 = vmatmul.f32.gmra.mxu0 %v200
        %v232 = vpop.f32.mrf.mxu0
        %v233 = vadd.f32 0.0, %v232
        %234 = vmatmul.f32.gmra.mxu0 %v203
        %v235 = vpop.f32.mrf.mxu0
        %v236 = vadd.f32 0.0, %v235
        %237 = vmatmul.f32.gmra.mxu0 %v206
        %v238 = vpop.f32.mrf.mxu0
        %v239 = vadd.f32 0.0, %v238
        %240 = vdwg.mxu0
        %v241 = vlaneseq
        %v242 = vshrl.u32 %v241, 7
        %v243 = vadd.s32 %v242, 8
        %v244 = vlaneseq
        %v245 = vand.u32 %v244, 127
        %v246 = vmul.u32 %v242, 2
        %v247 = vmul.u32 %v243, 2
        %vm248 = vcmp.eq.s32.totalorder %v245, %v246
        %vm249 = vcmp.eq.s32.totalorder %v245, %v247
        %v250 = vsel %vm248, 1, 0
        %v251 = vsel %vm249, 1, 0
        %v252 = vcvt.s32.f32 %v250
        %v253 = vcvt.s32.f32 %v251
        %v254 = vadd.s32 %v246, 1
        %v255 = vadd.s32 %v247, 1
        %vm256 = vcmp.eq.s32.totalorder %v245, %v254
        %vm257 = vcmp.eq.s32.totalorder %v245, %v255
        %v258 = vsel %vm256, 1, 0
        %v259 = vsel %vm257, 1, 0
        %v260 = vcvt.s32.f32 %v258
        %v261 = vcvt.s32.f32 %v259
        %v262 = vadd.s32 %v246, 32
        %v263 = vadd.s32 %v247, 32
        %vm264 = vcmp.eq.s32.totalorder %v245, %v262
        %vm265 = vcmp.eq.s32.totalorder %v245, %v263
        %v266 = vsel %vm264, 1, 0
        %v267 = vsel %vm265, 1, 0
        %v268 = vcvt.s32.f32 %v266
        %v269 = vcvt.s32.f32 %v267
        %v270 = vadd.s32 %v262, 1
        %v271 = vadd.s32 %v263, 1
        %vm272 = vcmp.eq.s32.totalorder %v245, %v270
        %vm273 = vcmp.eq.s32.totalorder %v245, %v271
        %v274 = vsel %vm272, 1, 0
        %v275 = vsel %vm273, 1, 0
        %v276 = vcvt.s32.f32 %v274
        %v277 = vcvt.s32.f32 %v275
        %v278 = vld [vmem:[%s2] sm:$0xff]
        %vm279 = vcmask 130048
        %v281 = vsel %vm279, %v230, 0
        %283 = vmatpush.msra.mxu0 0.0
        %284 = vmatpush.msra.mxu0 0.0
        %285 = vmatpush.msra.mxu0 0.0
        %286 = vmatpush.msra.mxu0 0.0
        %287 = vmatpush.msra.mxu0 0.0
        %288 = vmatpush.msra.mxu0 0.0
        %289 = vmatpush.msra.mxu0 0.0
        %290 = vmatpush.msra.mxu0 0.0
        %291 = vmatpush.msra.mxu0 0.0
        %292 = vmatpush.msra.mxu0 0.0
        %293 = vmatpush.msra.mxu0 0.0
        %294 = vmatpush.msra.mxu0 0.0
        %295 = vmatpush.msra.mxu0 0.0
        %296 = vmatpush.msra.mxu0 0.0
        %297 = vmatpush.msra.mxu0 %v253
        %298 = vmatpush.msra.mxu0 %v252
        %299 = vmatmul.f32.gmra.mxu0 %v281
        %v300 = vpop.f32.mrf.mxu0
        %v301 = vadd.f32 0.0, %v300
        %302 = vdwg.mxu0
        %304 = vset.pattern.permute.xlu0 0
        %305 = vperm.xlu0 %304, %v278
        %v306 = vpop.permute.xlu0 %305
        %v308 = vadd.f32 %v306, %v301
        %v310 = vsel %vm279, %v233, 0
        %312 = vmatpush.msra.mxu0 0.0
        %313 = vmatpush.msra.mxu0 0.0
        %314 = vmatpush.msra.mxu0 0.0
        %315 = vmatpush.msra.mxu0 0.0
        %316 = vmatpush.msra.mxu0 0.0
        %317 = vmatpush.msra.mxu0 0.0
        %318 = vmatpush.msra.mxu0 0.0
        %319 = vmatpush.msra.mxu0 0.0
        %320 = vmatpush.msra.mxu0 0.0
        %321 = vmatpush.msra.mxu0 0.0
        %322 = vmatpush.msra.mxu0 0.0
        %323 = vmatpush.msra.mxu0 0.0
        %324 = vmatpush.msra.mxu0 0.0
        %325 = vmatpush.msra.mxu0 0.0
        %326 = vmatpush.msra.mxu0 %v261
        %327 = vmatpush.msra.mxu0 %v260
        %328 = vmatmul.f32.gmra.mxu0 %v310
        %v329 = vpop.f32.mrf.mxu0
        %v330 = vadd.f32 0.0, %v329
        %331 = vdwg.mxu0
        %v332 = vadd.f32 %v308, %v330
        %v334 = vsel %vm279, %v236, 0
        %336 = vmatpush.msra.mxu0 0.0
        %337 = vmatpush.msra.mxu0 0.0
        %338 = vmatpush.msra.mxu0 0.0
        %339 = vmatpush.msra.mxu0 0.0
        %340 = vmatpush.msra.mxu0 0.0
        %341 = vmatpush.msra.mxu0 0.0
        %342 = vmatpush.msra.mxu0 0.0
        %343 = vmatpush.msra.mxu0 0.0
        %344 = vmatpush.msra.mxu0 0.0
        %345 = vmatpush.msra.mxu0 0.0
        %346 = vmatpush.msra.mxu0 0.0
        %347 = vmatpush.msra.mxu0 0.0
        %348 = vmatpush.msra.mxu0 0.0
        %349 = vmatpush.msra.mxu0 0.0
        %350 = vmatpush.msra.mxu0 %v269
        %351 = vmatpush.msra.mxu0 %v268
        %352 = vmatmul.f32.gmra.mxu0 %v334
        %v353 = vpop.f32.mrf.mxu0
        %v354 = vadd.f32 0.0, %v353
        %355 = vdwg.mxu0
        %v356 = vadd.f32 %v332, %v354
        %v358 = vsel %vm279, %v239, 0
        %360 = vmatpush.msra.mxu0 0.0
        %361 = vmatpush.msra.mxu0 0.0
        %362 = vmatpush.msra.mxu0 0.0
        %363 = vmatpush.msra.mxu0 0.0
        %364 = vmatpush.msra.mxu0 0.0
        %365 = vmatpush.msra.mxu0 0.0
        %366 = vmatpush.msra.mxu0 0.0
        %367 = vmatpush.msra.mxu0 0.0
        %368 = vmatpush.msra.mxu0 0.0
        %369 = vmatpush.msra.mxu0 0.0
        %370 = vmatpush.msra.mxu0 0.0
        %371 = vmatpush.msra.mxu0 0.0
        %372 = vmatpush.msra.mxu0 0.0
        %373 = vmatpush.msra.mxu0 0.0
        %374 = vmatpush.msra.mxu0 %v277
        %375 = vmatpush.msra.mxu0 %v276
        %376 = vmatmul.f32.gmra.mxu0 %v358
        %v377 = vpop.f32.mrf.mxu0
        %v378 = vadd.f32 0.0, %v377
        %379 = vdwg.mxu0
        %v380 = vadd.f32 %v356, %v378
        %v382 = vrot.slane %v380, 1
        %v383 = vrot.slane %v380, 2
        %v384 = vrot.slane %v380, 3
        %v385 = vrot.slane %v380, 4
        %v386 = vrot.slane %v380, 5
        %v387 = vrot.slane %v380, 6
        %v388 = vrot.slane %v380, 7
        %vm396 = vcmask 516096
        %397 = vst.msk [vmem:[%s181] sm:$0x1] %vm396, %v380
        %398 = vst.msk [vmem:[%s181 + $0x8] sm:$0x1] %vm396, %v382
        %399 = vst.msk [vmem:[%s181 + $0x10] sm:$0x1] %vm396, %v383
        %400 = vst.msk [vmem:[%s181 + $0x18] sm:$0x1] %vm396, %v384
        %401 = vst.msk [vmem:[%s181 + $0x20] sm:$0x1] %vm396, %v385
        %402 = vst.msk [vmem:[%s181 + $0x28] sm:$0x1] %vm396, %v386
        %403 = vst.msk [vmem:[%s181 + $0x30] sm:$0x1] %vm396, %v387
        %404 = vst.msk [vmem:[%s181 + $0x38] sm:$0x1] %vm396, %v388
        %405 = vrot.lane.b32.xlu0 %v230, 112
        %v406 = vpop.permute.xlu0 %405
        %v407 = vsel %vm279, %v406, 0
        %409 = vmatpush.msra.mxu0 0.0
        %410 = vmatpush.msra.mxu0 0.0
        %411 = vmatpush.msra.mxu0 0.0
        %412 = vmatpush.msra.mxu0 0.0
        %413 = vmatpush.msra.mxu0 0.0
        %414 = vmatpush.msra.mxu0 0.0
        %415 = vmatpush.msra.mxu0 0.0
        %416 = vmatpush.msra.mxu0 0.0
        %417 = vmatpush.msra.mxu0 0.0
        %418 = vmatpush.msra.mxu0 0.0
        %419 = vmatpush.msra.mxu0 0.0
        %420 = vmatpush.msra.mxu0 0.0
        %421 = vmatpush.msra.mxu0 0.0
        %422 = vmatpush.msra.mxu0 0.0
        %423 = vmatpush.msra.mxu0 %v253
        %424 = vmatpush.msra.mxu0 %v252
        %425 = vmatmul.f32.gmra.mxu0 %v407
        %v426 = vpop.f32.mrf.mxu0
        %v427 = vadd.f32 0.0, %v426
        %428 = vdwg.mxu0
        %v429 = vadd.f32 %v306, %v427
        %430 = vrot.lane.b32.xlu0 %v233, 112
        %v431 = vpop.permute.xlu0 %430
        %v432 = vsel %vm279, %v431, 0
        %434 = vmatpush.msra.mxu0 0.0
        %435 = vmatpush.msra.mxu0 0.0
        %436 = vmatpush.msra.mxu0 0.0
        %437 = vmatpush.msra.mxu0 0.0
        %438 = vmatpush.msra.mxu0 0.0
        %439 = vmatpush.msra.mxu0 0.0
        %440 = vmatpush.msra.mxu0 0.0
        %441 = vmatpush.msra.mxu0 0.0
        %442 = vmatpush.msra.mxu0 0.0
        %443 = vmatpush.msra.mxu0 0.0
        %444 = vmatpush.msra.mxu0 0.0
        %445 = vmatpush.msra.mxu0 0.0
        %446 = vmatpush.msra.mxu0 0.0
        %447 = vmatpush.msra.mxu0 0.0
        %448 = vmatpush.msra.mxu0 %v261
        %449 = vmatpush.msra.mxu0 %v260
        %450 = vmatmul.f32.gmra.mxu0 %v432
        %v451 = vpop.f32.mrf.mxu0
        %v452 = vadd.f32 0.0, %v451
        %453 = vdwg.mxu0
        %v454 = vadd.f32 %v429, %v452
        %455 = vrot.lane.b32.xlu0 %v236, 112
        %v456 = vpop.permute.xlu0 %455
        %v457 = vsel %vm279, %v456, 0
        %459 = vmatpush.msra.mxu0 0.0
        %460 = vmatpush.msra.mxu0 0.0
        %461 = vmatpush.msra.mxu0 0.0
        %462 = vmatpush.msra.mxu0 0.0
        %463 = vmatpush.msra.mxu0 0.0
        %464 = vmatpush.msra.mxu0 0.0
        %465 = vmatpush.msra.mxu0 0.0
        %466 = vmatpush.msra.mxu0 0.0
        %467 = vmatpush.msra.mxu0 0.0
        %468 = vmatpush.msra.mxu0 0.0
        %469 = vmatpush.msra.mxu0 0.0
        %470 = vmatpush.msra.mxu0 0.0
        %471 = vmatpush.msra.mxu0 0.0
        %472 = vmatpush.msra.mxu0 0.0
        %473 = vmatpush.msra.mxu0 %v269
        %474 = vmatpush.msra.mxu0 %v268
        %475 = vmatmul.f32.gmra.mxu0 %v457
        %v476 = vpop.f32.mrf.mxu0
        %v477 = vadd.f32 0.0, %v476
        %478 = vdwg.mxu0
        %v479 = vadd.f32 %v454, %v477
        %480 = vrot.lane.b32.xlu0 %v239, 112
        %v481 = vpop.permute.xlu0 %480
        %v482 = vsel %vm279, %v481, 0
        %484 = vmatpush.msra.mxu0 0.0
        %485 = vmatpush.msra.mxu0 0.0
        %486 = vmatpush.msra.mxu0 0.0
        %487 = vmatpush.msra.mxu0 0.0
        %488 = vmatpush.msra.mxu0 0.0
        %489 = vmatpush.msra.mxu0 0.0
        %490 = vmatpush.msra.mxu0 0.0
        %491 = vmatpush.msra.mxu0 0.0
        %492 = vmatpush.msra.mxu0 0.0
        %493 = vmatpush.msra.mxu0 0.0
        %494 = vmatpush.msra.mxu0 0.0
        %495 = vmatpush.msra.mxu0 0.0
        %496 = vmatpush.msra.mxu0 0.0
        %497 = vmatpush.msra.mxu0 0.0
        %498 = vmatpush.msra.mxu0 %v277
        %499 = vmatpush.msra.mxu0 %v276
        %500 = vmatmul.f32.gmra.mxu0 %v482
        %v501 = vpop.f32.mrf.mxu0
        %v502 = vadd.f32 0.0, %v501
        %503 = vdwg.mxu0
        %v504 = vadd.f32 %v479, %v502
        %v506 = vrot.slane %v504, 1
        %v507 = vrot.slane %v504, 2
        %v508 = vrot.slane %v504, 3
        %v509 = vrot.slane %v504, 4
        %v510 = vrot.slane %v504, 5
        %v511 = vrot.slane %v504, 6
        %v512 = vrot.slane %v504, 7
        %520 = vst.msk [vmem:[%s181 + $0x1] sm:$0x1] %vm396, %v504
        %521 = vst.msk [vmem:[%s181 + $0x9] sm:$0x1] %vm396, %v506
        %522 = vst.msk [vmem:[%s181 + $0x11] sm:$0x1] %vm396, %v507
        %523 = vst.msk [vmem:[%s181 + $0x19] sm:$0x1] %vm396, %v508
        %524 = vst.msk [vmem:[%s181 + $0x21] sm:$0x1] %vm396, %v509
        %525 = vst.msk [vmem:[%s181 + $0x29] sm:$0x1] %vm396, %v510
        %526 = vst.msk [vmem:[%s181 + $0x31] sm:$0x1] %vm396, %v511
        %527 = vst.msk [vmem:[%s181 + $0x39] sm:$0x1] %vm396, %v512
        %528 = vrot.lane.b32.xlu0 %v230, 96
        %v529 = vpop.permute.xlu0 %528
        %v530 = vsel %vm279, %v529, 0
        %532 = vmatpush.msra.mxu0 0.0
        %533 = vmatpush.msra.mxu0 0.0
        %534 = vmatpush.msra.mxu0 0.0
        %535 = vmatpush.msra.mxu0 0.0
        %536 = vmatpush.msra.mxu0 0.0
        %537 = vmatpush.msra.mxu0 0.0
        %538 = vmatpush.msra.mxu0 0.0
        %539 = vmatpush.msra.mxu0 0.0
        %540 = vmatpush.msra.mxu0 0.0
        %541 = vmatpush.msra.mxu0 0.0
        %542 = vmatpush.msra.mxu0 0.0
        %543 = vmatpush.msra.mxu0 0.0
        %544 = vmatpush.msra.mxu0 0.0
        %545 = vmatpush.msra.mxu0 0.0
        %546 = vmatpush.msra.mxu0 %v253
        %547 = vmatpush.msra.mxu0 %v252
        %548 = vmatmul.f32.gmra.mxu0 %v530
        %v549 = vpop.f32.mrf.mxu0
        %v550 = vadd.f32 0.0, %v549
        %551 = vdwg.mxu0
        %v552 = vadd.f32 %v306, %v550
        %553 = vrot.lane.b32.xlu0 %v233, 96
        %v554 = vpop.permute.xlu0 %553
        %v555 = vsel %vm279, %v554, 0
        %557 = vmatpush.msra.mxu0 0.0
        %558 = vmatpush.msra.mxu0 0.0
        %559 = vmatpush.msra.mxu0 0.0
        %560 = vmatpush.msra.mxu0 0.0
        %561 = vmatpush.msra.mxu0 0.0
        %562 = vmatpush.msra.mxu0 0.0
        %563 = vmatpush.msra.mxu0 0.0
        %564 = vmatpush.msra.mxu0 0.0
        %565 = vmatpush.msra.mxu0 0.0
        %566 = vmatpush.msra.mxu0 0.0
        %567 = vmatpush.msra.mxu0 0.0
        %568 = vmatpush.msra.mxu0 0.0
        %569 = vmatpush.msra.mxu0 0.0
        %570 = vmatpush.msra.mxu0 0.0
        %571 = vmatpush.msra.mxu0 %v261
        %572 = vmatpush.msra.mxu0 %v260
        %573 = vmatmul.f32.gmra.mxu0 %v555
        %v574 = vpop.f32.mrf.mxu0
        %v575 = vadd.f32 0.0, %v574
        %576 = vdwg.mxu0
        %v577 = vadd.f32 %v552, %v575
        %578 = vrot.lane.b32.xlu0 %v236, 96
        %v579 = vpop.permute.xlu0 %578
        %v580 = vsel %vm279, %v579, 0
        %582 = vmatpush.msra.mxu0 0.0
        %583 = vmatpush.msra.mxu0 0.0
        %584 = vmatpush.msra.mxu0 0.0
        %585 = vmatpush.msra.mxu0 0.0
        %586 = vmatpush.msra.mxu0 0.0
        %587 = vmatpush.msra.mxu0 0.0
        %588 = vmatpush.msra.mxu0 0.0
        %589 = vmatpush.msra.mxu0 0.0
        %590 = vmatpush.msra.mxu0 0.0
        %591 = vmatpush.msra.mxu0 0.0
        %592 = vmatpush.msra.mxu0 0.0
        %593 = vmatpush.msra.mxu0 0.0
        %594 = vmatpush.msra.mxu0 0.0
        %595 = vmatpush.msra.mxu0 0.0
        %596 = vmatpush.msra.mxu0 %v269
        %597 = vmatpush.msra.mxu0 %v268
        %598 = vmatmul.f32.gmra.mxu0 %v580
        %v599 = vpop.f32.mrf.mxu0
        %v600 = vadd.f32 0.0, %v599
        %601 = vdwg.mxu0
        %v602 = vadd.f32 %v577, %v600
        %603 = vrot.lane.b32.xlu0 %v239, 96
        %v604 = vpop.permute.xlu0 %603
        %v605 = vsel %vm279, %v604, 0
        %607 = vmatpush.msra.mxu0 0.0
        %608 = vmatpush.msra.mxu0 0.0
        %609 = vmatpush.msra.mxu0 0.0
        %610 = vmatpush.msra.mxu0 0.0
        %611 = vmatpush.msra.mxu0 0.0
        %612 = vmatpush.msra.mxu0 0.0
        %613 = vmatpush.msra.mxu0 0.0
        %614 = vmatpush.msra.mxu0 0.0
        %615 = vmatpush.msra.mxu0 0.0
        %616 = vmatpush.msra.mxu0 0.0
        %617 = vmatpush.msra.mxu0 0.0
        %618 = vmatpush.msra.mxu0 0.0
        %619 = vmatpush.msra.mxu0 0.0
        %620 = vmatpush.msra.mxu0 0.0
        %621 = vmatpush.msra.mxu0 %v277
        %622 = vmatpush.msra.mxu0 %v276
        %623 = vmatmul.f32.gmra.mxu0 %v605
        %v624 = vpop.f32.mrf.mxu0
        %v625 = vadd.f32 0.0, %v624
        %626 = vdwg.mxu0
        %v627 = vadd.f32 %v602, %v625
        %v629 = vrot.slane %v627, 1
        %v630 = vrot.slane %v627, 2
        %v631 = vrot.slane %v627, 3
        %v632 = vrot.slane %v627, 4
        %v633 = vrot.slane %v627, 5
        %v634 = vrot.slane %v627, 6
        %v635 = vrot.slane %v627, 7
        %643 = vst.msk [vmem:[%s181 + $0x2] sm:$0x1] %vm396, %v627
        %644 = vst.msk [vmem:[%s181 + $0xa] sm:$0x1] %vm396, %v629
        %645 = vst.msk [vmem:[%s181 + $0x12] sm:$0x1] %vm396, %v630
        %646 = vst.msk [vmem:[%s181 + $0x1a] sm:$0x1] %vm396, %v631
        %647 = vst.msk [vmem:[%s181 + $0x22] sm:$0x1] %vm396, %v632
        %648 = vst.msk [vmem:[%s181 + $0x2a] sm:$0x1] %vm396, %v633
        %649 = vst.msk [vmem:[%s181 + $0x32] sm:$0x1] %vm396, %v634
        %650 = vst.msk [vmem:[%s181 + $0x3a] sm:$0x1] %vm396, %v635
        %651 = vrot.lane.b32.xlu0 %v230, 80
        %v652 = vpop.permute.xlu0 %651
        %v653 = vsel %vm279, %v652, 0
        %655 = vmatpush.msra.mxu0 0.0
        %656 = vmatpush.msra.mxu0 0.0
        %657 = vmatpush.msra.mxu0 0.0
        %658 = vmatpush.msra.mxu0 0.0
        %659 = vmatpush.msra.mxu0 0.0
        %660 = vmatpush.msra.mxu0 0.0
        %661 = vmatpush.msra.mxu0 0.0
        %662 = vmatpush.msra.mxu0 0.0
        %663 = vmatpush.msra.mxu0 0.0
        %664 = vmatpush.msra.mxu0 0.0
        %665 = vmatpush.msra.mxu0 0.0
        %666 = vmatpush.msra.mxu0 0.0
        %667 = vmatpush.msra.mxu0 0.0
        %668 = vmatpush.msra.mxu0 0.0
        %669 = vmatpush.msra.mxu0 %v253
        %670 = vmatpush.msra.mxu0 %v252
        %671 = vmatmul.f32.gmra.mxu0 %v653
        %v672 = vpop.f32.mrf.mxu0
        %v673 = vadd.f32 0.0, %v672
        %674 = vdwg.mxu0
        %v675 = vadd.f32 %v306, %v673
        %676 = vrot.lane.b32.xlu0 %v233, 80
        %v677 = vpop.permute.xlu0 %676
        %v678 = vsel %vm279, %v677, 0
        %680 = vmatpush.msra.mxu0 0.0
        %681 = vmatpush.msra.mxu0 0.0
        %682 = vmatpush.msra.mxu0 0.0
        %683 = vmatpush.msra.mxu0 0.0
        %684 = vmatpush.msra.mxu0 0.0
        %685 = vmatpush.msra.mxu0 0.0
        %686 = vmatpush.msra.mxu0 0.0
        %687 = vmatpush.msra.mxu0 0.0
        %688 = vmatpush.msra.mxu0 0.0
        %689 = vmatpush.msra.mxu0 0.0
        %690 = vmatpush.msra.mxu0 0.0
        %691 = vmatpush.msra.mxu0 0.0
        %692 = vmatpush.msra.mxu0 0.0
        %693 = vmatpush.msra.mxu0 0.0
        %694 = vmatpush.msra.mxu0 %v261
        %695 = vmatpush.msra.mxu0 %v260
        %696 = vmatmul.f32.gmra.mxu0 %v678
        %v697 = vpop.f32.mrf.mxu0
        %v698 = vadd.f32 0.0, %v697
        %699 = vdwg.mxu0
        %v700 = vadd.f32 %v675, %v698
        %701 = vrot.lane.b32.xlu0 %v236, 80
        %v702 = vpop.permute.xlu0 %701
        %v703 = vsel %vm279, %v702, 0
        %705 = vmatpush.msra.mxu0 0.0
        %706 = vmatpush.msra.mxu0 0.0
        %707 = vmatpush.msra.mxu0 0.0
        %708 = vmatpush.msra.mxu0 0.0
        %709 = vmatpush.msra.mxu0 0.0
        %710 = vmatpush.msra.mxu0 0.0
        %711 = vmatpush.msra.mxu0 0.0
        %712 = vmatpush.msra.mxu0 0.0
        %713 = vmatpush.msra.mxu0 0.0
        %714 = vmatpush.msra.mxu0 0.0
        %715 = vmatpush.msra.mxu0 0.0
        %716 = vmatpush.msra.mxu0 0.0
        %717 = vmatpush.msra.mxu0 0.0
        %718 = vmatpush.msra.mxu0 0.0
        %719 = vmatpush.msra.mxu0 %v269
        %720 = vmatpush.msra.mxu0 %v268
        %721 = vmatmul.f32.gmra.mxu0 %v703
        %v722 = vpop.f32.mrf.mxu0
        %v723 = vadd.f32 0.0, %v722
        %724 = vdwg.mxu0
        %v725 = vadd.f32 %v700, %v723
        %726 = vrot.lane.b32.xlu0 %v239, 80
        %v727 = vpop.permute.xlu0 %726
        %v728 = vsel %vm279, %v727, 0
        %730 = vmatpush.msra.mxu0 0.0
        %731 = vmatpush.msra.mxu0 0.0
        %732 = vmatpush.msra.mxu0 0.0
        %733 = vmatpush.msra.mxu0 0.0
        %734 = vmatpush.msra.mxu0 0.0
        %735 = vmatpush.msra.mxu0 0.0
        %736 = vmatpush.msra.mxu0 0.0
        %737 = vmatpush.msra.mxu0 0.0
        %738 = vmatpush.msra.mxu0 0.0
        %739 = vmatpush.msra.mxu0 0.0
        %740 = vmatpush.msra.mxu0 0.0
        %741 = vmatpush.msra.mxu0 0.0
        %742 = vmatpush.msra.mxu0 0.0
        %743 = vmatpush.msra.mxu0 0.0
        %744 = vmatpush.msra.mxu0 %v277
        %745 = vmatpush.msra.mxu0 %v276
        %746 = vmatmul.f32.gmra.mxu0 %v728
        %v747 = vpop.f32.mrf.mxu0
        %v748 = vadd.f32 0.0, %v747
        %749 = vdwg.mxu0
        %v750 = vadd.f32 %v725, %v748
        %v752 = vrot.slane %v750, 1
        %v753 = vrot.slane %v750, 2
        %v754 = vrot.slane %v750, 3
        %v755 = vrot.slane %v750, 4
        %v756 = vrot.slane %v750, 5
        %v757 = vrot.slane %v750, 6
        %v758 = vrot.slane %v750, 7
        %766 = vst.msk [vmem:[%s181 + $0x3] sm:$0x1] %vm396, %v750
        %767 = vst.msk [vmem:[%s181 + $0xb] sm:$0x1] %vm396, %v752
        %768 = vst.msk [vmem:[%s181 + $0x13] sm:$0x1] %vm396, %v753
        %769 = vst.msk [vmem:[%s181 + $0x1b] sm:$0x1] %vm396, %v754
        %770 = vst.msk [vmem:[%s181 + $0x23] sm:$0x1] %vm396, %v755
        %771 = vst.msk [vmem:[%s181 + $0x2b] sm:$0x1] %vm396, %v756
        %772 = vst.msk [vmem:[%s181 + $0x33] sm:$0x1] %vm396, %v757
        %773 = vst.msk [vmem:[%s181 + $0x3b] sm:$0x1] %vm396, %v758
        %774 = vrot.lane.b32.xlu0 %v230, 64
        %v775 = vpop.permute.xlu0 %774
        %v776 = vsel %vm279, %v775, 0
        %778 = vmatpush.msra.mxu0 0.0
        %779 = vmatpush.msra.mxu0 0.0
        %780 = vmatpush.msra.mxu0 0.0
        %781 = vmatpush.msra.mxu0 0.0
        %782 = vmatpush.msra.mxu0 0.0
        %783 = vmatpush.msra.mxu0 0.0
        %784 = vmatpush.msra.mxu0 0.0
        %785 = vmatpush.msra.mxu0 0.0
        %786 = vmatpush.msra.mxu0 0.0
        %787 = vmatpush.msra.mxu0 0.0
        %788 = vmatpush.msra.mxu0 0.0
        %789 = vmatpush.msra.mxu0 0.0
        %790 = vmatpush.msra.mxu0 0.0
        %791 = vmatpush.msra.mxu0 0.0
        %792 = vmatpush.msra.mxu0 %v253
        %793 = vmatpush.msra.mxu0 %v252
        %794 = vmatmul.f32.gmra.mxu0 %v776
        %v795 = vpop.f32.mrf.mxu0
        %v796 = vadd.f32 0.0, %v795
        %797 = vdwg.mxu0
        %v798 = vadd.f32 %v306, %v796
        %799 = vrot.lane.b32.xlu0 %v233, 64
        %v800 = vpop.permute.xlu0 %799
        %v801 = vsel %vm279, %v800, 0
        %803 = vmatpush.msra.mxu0 0.0
        %804 = vmatpush.msra.mxu0 0.0
        %805 = vmatpush.msra.mxu0 0.0
        %806 = vmatpush.msra.mxu0 0.0
        %807 = vmatpush.msra.mxu0 0.0
        %808 = vmatpush.msra.mxu0 0.0
        %809 = vmatpush.msra.mxu0 0.0
        %810 = vmatpush.msra.mxu0 0.0
        %811 = vmatpush.msra.mxu0 0.0
        %812 = vmatpush.msra.mxu0 0.0
        %813 = vmatpush.msra.mxu0 0.0
        %814 = vmatpush.msra.mxu0 0.0
        %815 = vmatpush.msra.mxu0 0.0
        %816 = vmatpush.msra.mxu0 0.0
        %817 = vmatpush.msra.mxu0 %v261
        %818 = vmatpush.msra.mxu0 %v260
        %819 = vmatmul.f32.gmra.mxu0 %v801
        %v820 = vpop.f32.mrf.mxu0
        %v821 = vadd.f32 0.0, %v820
        %822 = vdwg.mxu0
        %v823 = vadd.f32 %v798, %v821
        %824 = vrot.lane.b32.xlu0 %v236, 64
        %v825 = vpop.permute.xlu0 %824
        %v826 = vsel %vm279, %v825, 0
        %828 = vmatpush.msra.mxu0 0.0
        %829 = vmatpush.msra.mxu0 0.0
        %830 = vmatpush.msra.mxu0 0.0
        %831 = vmatpush.msra.mxu0 0.0
        %832 = vmatpush.msra.mxu0 0.0
        %833 = vmatpush.msra.mxu0 0.0
        %834 = vmatpush.msra.mxu0 0.0
        %835 = vmatpush.msra.mxu0 0.0
        %836 = vmatpush.msra.mxu0 0.0
        %837 = vmatpush.msra.mxu0 0.0
        %838 = vmatpush.msra.mxu0 0.0
        %839 = vmatpush.msra.mxu0 0.0
        %840 = vmatpush.msra.mxu0 0.0
        %841 = vmatpush.msra.mxu0 0.0
        %842 = vmatpush.msra.mxu0 %v269
        %843 = vmatpush.msra.mxu0 %v268
        %844 = vmatmul.f32.gmra.mxu0 %v826
        %v845 = vpop.f32.mrf.mxu0
        %v846 = vadd.f32 0.0, %v845
        %847 = vdwg.mxu0
        %v848 = vadd.f32 %v823, %v846
        %849 = vrot.lane.b32.xlu0 %v239, 64
        %v850 = vpop.permute.xlu0 %849
        %v851 = vsel %vm279, %v850, 0
        %853 = vmatpush.msra.mxu0 0.0
        %854 = vmatpush.msra.mxu0 0.0
        %855 = vmatpush.msra.mxu0 0.0
        %856 = vmatpush.msra.mxu0 0.0
        %857 = vmatpush.msra.mxu0 0.0
        %858 = vmatpush.msra.mxu0 0.0
        %859 = vmatpush.msra.mxu0 0.0
        %860 = vmatpush.msra.mxu0 0.0
        %861 = vmatpush.msra.mxu0 0.0
        %862 = vmatpush.msra.mxu0 0.0
        %863 = vmatpush.msra.mxu0 0.0
        %864 = vmatpush.msra.mxu0 0.0
        %865 = vmatpush.msra.mxu0 0.0
        %866 = vmatpush.msra.mxu0 0.0
        %867 = vmatpush.msra.mxu0 %v277
        %868 = vmatpush.msra.mxu0 %v276
        %869 = vmatmul.f32.gmra.mxu0 %v851
        %v870 = vpop.f32.mrf.mxu0
        %v871 = vadd.f32 0.0, %v870
        %872 = vdwg.mxu0
        %v873 = vadd.f32 %v848, %v871
        %v875 = vrot.slane %v873, 1
        %v876 = vrot.slane %v873, 2
        %v877 = vrot.slane %v873, 3
        %v878 = vrot.slane %v873, 4
        %v879 = vrot.slane %v873, 5
        %v880 = vrot.slane %v873, 6
        %v881 = vrot.slane %v873, 7
        %889 = vst.msk [vmem:[%s181 + $0x4] sm:$0x1] %vm396, %v873
        %890 = vst.msk [vmem:[%s181 + $0xc] sm:$0x1] %vm396, %v875
        %891 = vst.msk [vmem:[%s181 + $0x14] sm:$0x1] %vm396, %v876
        %892 = vst.msk [vmem:[%s181 + $0x1c] sm:$0x1] %vm396, %v877
        %893 = vst.msk [vmem:[%s181 + $0x24] sm:$0x1] %vm396, %v878
        %894 = vst.msk [vmem:[%s181 + $0x2c] sm:$0x1] %vm396, %v879
        %895 = vst.msk [vmem:[%s181 + $0x34] sm:$0x1] %vm396, %v880
        %896 = vst.msk [vmem:[%s181 + $0x3c] sm:$0x1] %vm396, %v881
        %897 = vrot.lane.b32.xlu0 %v230, 48
        %v898 = vpop.permute.xlu0 %897
        %v899 = vsel %vm279, %v898, 0
        %901 = vmatpush.msra.mxu0 0.0
        %902 = vmatpush.msra.mxu0 0.0
        %903 = vmatpush.msra.mxu0 0.0
        %904 = vmatpush.msra.mxu0 0.0
        %905 = vmatpush.msra.mxu0 0.0
        %906 = vmatpush.msra.mxu0 0.0
        %907 = vmatpush.msra.mxu0 0.0
        %908 = vmatpush.msra.mxu0 0.0
        %909 = vmatpush.msra.mxu0 0.0
        %910 = vmatpush.msra.mxu0 0.0
        %911 = vmatpush.msra.mxu0 0.0
        %912 = vmatpush.msra.mxu0 0.0
        %913 = vmatpush.msra.mxu0 0.0
        %914 = vmatpush.msra.mxu0 0.0
        %915 = vmatpush.msra.mxu0 %v253
        %916 = vmatpush.msra.mxu0 %v252
        %917 = vmatmul.f32.gmra.mxu0 %v899
        %v918 = vpop.f32.mrf.mxu0
        %v919 = vadd.f32 0.0, %v918
        %920 = vdwg.mxu0
        %v921 = vadd.f32 %v306, %v919
        %922 = vrot.lane.b32.xlu0 %v233, 48
        %v923 = vpop.permute.xlu0 %922
        %v924 = vsel %vm279, %v923, 0
        %926 = vmatpush.msra.mxu0 0.0
        %927 = vmatpush.msra.mxu0 0.0
        %928 = vmatpush.msra.mxu0 0.0
        %929 = vmatpush.msra.mxu0 0.0
        %930 = vmatpush.msra.mxu0 0.0
        %931 = vmatpush.msra.mxu0 0.0
        %932 = vmatpush.msra.mxu0 0.0
        %933 = vmatpush.msra.mxu0 0.0
        %934 = vmatpush.msra.mxu0 0.0
        %935 = vmatpush.msra.mxu0 0.0
        %936 = vmatpush.msra.mxu0 0.0
        %937 = vmatpush.msra.mxu0 0.0
        %938 = vmatpush.msra.mxu0 0.0
        %939 = vmatpush.msra.mxu0 0.0
        %940 = vmatpush.msra.mxu0 %v261
        %941 = vmatpush.msra.mxu0 %v260
        %942 = vmatmul.f32.gmra.mxu0 %v924
        %v943 = vpop.f32.mrf.mxu0
        %v944 = vadd.f32 0.0, %v943
        %945 = vdwg.mxu0
        %v946 = vadd.f32 %v921, %v944
        %947 = vrot.lane.b32.xlu0 %v236, 48
        %v948 = vpop.permute.xlu0 %947
        %v949 = vsel %vm279, %v948, 0
        %951 = vmatpush.msra.mxu0 0.0
        %952 = vmatpush.msra.mxu0 0.0
        %953 = vmatpush.msra.mxu0 0.0
        %954 = vmatpush.msra.mxu0 0.0
        %955 = vmatpush.msra.mxu0 0.0
        %956 = vmatpush.msra.mxu0 0.0
        %957 = vmatpush.msra.mxu0 0.0
        %958 = vmatpush.msra.mxu0 0.0
        %959 = vmatpush.msra.mxu0 0.0
        %960 = vmatpush.msra.mxu0 0.0
        %961 = vmatpush.msra.mxu0 0.0
        %962 = vmatpush.msra.mxu0 0.0
        %963 = vmatpush.msra.mxu0 0.0
        %964 = vmatpush.msra.mxu0 0.0
        %965 = vmatpush.msra.mxu0 %v269
        %966 = vmatpush.msra.mxu0 %v268
        %967 = vmatmul.f32.gmra.mxu0 %v949
        %v968 = vpop.f32.mrf.mxu0
        %v969 = vadd.f32 0.0, %v968
        %970 = vdwg.mxu0
        %v971 = vadd.f32 %v946, %v969
        %972 = vrot.lane.b32.xlu0 %v239, 48
        %v973 = vpop.permute.xlu0 %972
        %v974 = vsel %vm279, %v973, 0
        %976 = vmatpush.msra.mxu0 0.0
        %977 = vmatpush.msra.mxu0 0.0
        %978 = vmatpush.msra.mxu0 0.0
        %979 = vmatpush.msra.mxu0 0.0
        %980 = vmatpush.msra.mxu0 0.0
        %981 = vmatpush.msra.mxu0 0.0
        %982 = vmatpush.msra.mxu0 0.0
        %983 = vmatpush.msra.mxu0 0.0
        %984 = vmatpush.msra.mxu0 0.0
        %985 = vmatpush.msra.mxu0 0.0
        %986 = vmatpush.msra.mxu0 0.0
        %987 = vmatpush.msra.mxu0 0.0
        %988 = vmatpush.msra.mxu0 0.0
        %989 = vmatpush.msra.mxu0 0.0
        %990 = vmatpush.msra.mxu0 %v277
        %991 = vmatpush.msra.mxu0 %v276
        %992 = vmatmul.f32.gmra.mxu0 %v974
        %v993 = vpop.f32.mrf.mxu0
        %v994 = vadd.f32 0.0, %v993
        %995 = vdwg.mxu0
        %v996 = vadd.f32 %v971, %v994
        %v998 = vrot.slane %v996, 1
        %v999 = vrot.slane %v996, 2
        %v1000 = vrot.slane %v996, 3
        %v1001 = vrot.slane %v996, 4
        %v1002 = vrot.slane %v996, 5
        %v1003 = vrot.slane %v996, 6
        %v1004 = vrot.slane %v996, 7
        %1012 = vst.msk [vmem:[%s181 + $0x5] sm:$0x1] %vm396, %v996
        %1013 = vst.msk [vmem:[%s181 + $0xd] sm:$0x1] %vm396, %v998
        %1014 = vst.msk [vmem:[%s181 + $0x15] sm:$0x1] %vm396, %v999
        %1015 = vst.msk [vmem:[%s181 + $0x1d] sm:$0x1] %vm396, %v1000
        %1016 = vst.msk [vmem:[%s181 + $0x25] sm:$0x1] %vm396, %v1001
        %1017 = vst.msk [vmem:[%s181 + $0x2d] sm:$0x1] %vm396, %v1002
        %1018 = vst.msk [vmem:[%s181 + $0x35] sm:$0x1] %vm396, %v1003
        %1019 = vst.msk [vmem:[%s181 + $0x3d] sm:$0x1] %vm396, %v1004
        %1020 = vrot.lane.b32.xlu0 %v230, 32
        %v1021 = vpop.permute.xlu0 %1020
        %v1022 = vsel %vm279, %v1021, 0
        %1024 = vmatpush.msra.mxu0 0.0
        %1025 = vmatpush.msra.mxu0 0.0
        %1026 = vmatpush.msra.mxu0 0.0
        %1027 = vmatpush.msra.mxu0 0.0
        %1028 = vmatpush.msra.mxu0 0.0
        %1029 = vmatpush.msra.mxu0 0.0
        %1030 = vmatpush.msra.mxu0 0.0
        %1031 = vmatpush.msra.mxu0 0.0
        %1032 = vmatpush.msra.mxu0 0.0
        %1033 = vmatpush.msra.mxu0 0.0
        %1034 = vmatpush.msra.mxu0 0.0
        %1035 = vmatpush.msra.mxu0 0.0
        %1036 = vmatpush.msra.mxu0 0.0
        %1037 = vmatpush.msra.mxu0 0.0
        %1038 = vmatpush.msra.mxu0 %v253
        %1039 = vmatpush.msra.mxu0 %v252
        %1040 = vmatmul.f32.gmra.mxu0 %v1022
        %v1041 = vpop.f32.mrf.mxu0
        %v1042 = vadd.f32 0.0, %v1041
        %1043 = vdwg.mxu0
        %v1044 = vadd.f32 %v306, %v1042
        %1045 = vrot.lane.b32.xlu0 %v233, 32
        %v1046 = vpop.permute.xlu0 %1045
        %v1047 = vsel %vm279, %v1046, 0
        %1049 = vmatpush.msra.mxu0 0.0
        %1050 = vmatpush.msra.mxu0 0.0
        %1051 = vmatpush.msra.mxu0 0.0
        %1052 = vmatpush.msra.mxu0 0.0
        %1053 = vmatpush.msra.mxu0 0.0
        %1054 = vmatpush.msra.mxu0 0.0
        %1055 = vmatpush.msra.mxu0 0.0
        %1056 = vmatpush.msra.mxu0 0.0
        %1057 = vmatpush.msra.mxu0 0.0
        %1058 = vmatpush.msra.mxu0 0.0
        %1059 = vmatpush.msra.mxu0 0.0
        %1060 = vmatpush.msra.mxu0 0.0
        %1061 = vmatpush.msra.mxu0 0.0
        %1062 = vmatpush.msra.mxu0 0.0
        %1063 = vmatpush.msra.mxu0 %v261
        %1064 = vmatpush.msra.mxu0 %v260
        %1065 = vmatmul.f32.gmra.mxu0 %v1047
        %v1066 = vpop.f32.mrf.mxu0
        %v1067 = vadd.f32 0.0, %v1066
        %1068 = vdwg.mxu0
        %v1069 = vadd.f32 %v1044, %v1067
        %1070 = vrot.lane.b32.xlu0 %v236, 32
        %v1071 = vpop.permute.xlu0 %1070
        %v1072 = vsel %vm279, %v1071, 0
        %1074 = vmatpush.msra.mxu0 0.0
        %1075 = vmatpush.msra.mxu0 0.0
        %1076 = vmatpush.msra.mxu0 0.0
        %1077 = vmatpush.msra.mxu0 0.0
        %1078 = vmatpush.msra.mxu0 0.0
        %1079 = vmatpush.msra.mxu0 0.0
        %1080 = vmatpush.msra.mxu0 0.0
        %1081 = vmatpush.msra.mxu0 0.0
        %1082 = vmatpush.msra.mxu0 0.0
        %1083 = vmatpush.msra.mxu0 0.0
        %1084 = vmatpush.msra.mxu0 0.0
        %1085 = vmatpush.msra.mxu0 0.0
        %1086 = vmatpush.msra.mxu0 0.0
        %1087 = vmatpush.msra.mxu0 0.0
        %1088 = vmatpush.msra.mxu0 %v269
        %1089 = vmatpush.msra.mxu0 %v268
        %1090 = vmatmul.f32.gmra.mxu0 %v1072
        %v1091 = vpop.f32.mrf.mxu0
        %v1092 = vadd.f32 0.0, %v1091
        %1093 = vdwg.mxu0
        %v1094 = vadd.f32 %v1069, %v1092
        %1095 = vrot.lane.b32.xlu0 %v239, 32
        %v1096 = vpop.permute.xlu0 %1095
        %v1097 = vsel %vm279, %v1096, 0
        %1099 = vmatpush.msra.mxu0 0.0
        %1100 = vmatpush.msra.mxu0 0.0
        %1101 = vmatpush.msra.mxu0 0.0
        %1102 = vmatpush.msra.mxu0 0.0
        %1103 = vmatpush.msra.mxu0 0.0
        %1104 = vmatpush.msra.mxu0 0.0
        %1105 = vmatpush.msra.mxu0 0.0
        %1106 = vmatpush.msra.mxu0 0.0
        %1107 = vmatpush.msra.mxu0 0.0
        %1108 = vmatpush.msra.mxu0 0.0
        %1109 = vmatpush.msra.mxu0 0.0
        %1110 = vmatpush.msra.mxu0 0.0
        %1111 = vmatpush.msra.mxu0 0.0
        %1112 = vmatpush.msra.mxu0 0.0
        %1113 = vmatpush.msra.mxu0 %v277
        %1114 = vmatpush.msra.mxu0 %v276
        %1115 = vmatmul.f32.gmra.mxu0 %v1097
        %v1116 = vpop.f32.mrf.mxu0
        %v1117 = vadd.f32 0.0, %v1116
        %1118 = vdwg.mxu0
        %v1119 = vadd.f32 %v1094, %v1117
        %v1121 = vrot.slane %v1119, 1
        %v1122 = vrot.slane %v1119, 2
        %v1123 = vrot.slane %v1119, 3
        %v1124 = vrot.slane %v1119, 4
        %v1125 = vrot.slane %v1119, 5
        %v1126 = vrot.slane %v1119, 6
        %v1127 = vrot.slane %v1119, 7
        %1135 = vst.msk [vmem:[%s181 + $0x6] sm:$0x1] %vm396, %v1119
        %1136 = vst.msk [vmem:[%s181 + $0xe] sm:$0x1] %vm396, %v1121
        %1137 = vst.msk [vmem:[%s181 + $0x16] sm:$0x1] %vm396, %v1122
        %1138 = vst.msk [vmem:[%s181 + $0x1e] sm:$0x1] %vm396, %v1123
        %1139 = vst.msk [vmem:[%s181 + $0x26] sm:$0x1] %vm396, %v1124
        %1140 = vst.msk [vmem:[%s181 + $0x2e] sm:$0x1] %vm396, %v1125
        %1141 = vst.msk [vmem:[%s181 + $0x36] sm:$0x1] %vm396, %v1126
        %1142 = vst.msk [vmem:[%s181 + $0x3e] sm:$0x1] %vm396, %v1127
        %1143 = vrot.lane.b32.xlu0 %v230, 16
        %v1144 = vpop.permute.xlu0 %1143
        %v1145 = vsel %vm279, %v1144, 0
        %1147 = vmatpush.msra.mxu0 0.0
        %1148 = vmatpush.msra.mxu0 0.0
        %1149 = vmatpush.msra.mxu0 0.0
        %1150 = vmatpush.msra.mxu0 0.0
        %1151 = vmatpush.msra.mxu0 0.0
        %1152 = vmatpush.msra.mxu0 0.0
        %1153 = vmatpush.msra.mxu0 0.0
        %1154 = vmatpush.msra.mxu0 0.0
        %1155 = vmatpush.msra.mxu0 0.0
        %1156 = vmatpush.msra.mxu0 0.0
        %1157 = vmatpush.msra.mxu0 0.0
        %1158 = vmatpush.msra.mxu0 0.0
        %1159 = vmatpush.msra.mxu0 0.0
        %1160 = vmatpush.msra.mxu0 0.0
        %1161 = vmatpush.msra.mxu0 %v253
        %1162 = vmatpush.msra.mxu0 %v252
        %1163 = vmatmul.f32.gmra.mxu0 %v1145
        %v1164 = vpop.f32.mrf.mxu0
        %v1165 = vadd.f32 0.0, %v1164
        %1166 = vdwg.mxu0
        %v1167 = vadd.f32 %v306, %v1165
        %1168 = vrot.lane.b32.xlu0 %v233, 16
        %v1169 = vpop.permute.xlu0 %1168
        %v1170 = vsel %vm279, %v1169, 0
        %1172 = vmatpush.msra.mxu0 0.0
        %1173 = vmatpush.msra.mxu0 0.0
        %1174 = vmatpush.msra.mxu0 0.0
        %1175 = vmatpush.msra.mxu0 0.0
        %1176 = vmatpush.msra.mxu0 0.0
        %1177 = vmatpush.msra.mxu0 0.0
        %1178 = vmatpush.msra.mxu0 0.0
        %1179 = vmatpush.msra.mxu0 0.0
        %1180 = vmatpush.msra.mxu0 0.0
        %1181 = vmatpush.msra.mxu0 0.0
        %1182 = vmatpush.msra.mxu0 0.0
        %1183 = vmatpush.msra.mxu0 0.0
        %1184 = vmatpush.msra.mxu0 0.0
        %1185 = vmatpush.msra.mxu0 0.0
        %1186 = vmatpush.msra.mxu0 %v261
        %1187 = vmatpush.msra.mxu0 %v260
        %1188 = vmatmul.f32.gmra.mxu0 %v1170
        %v1189 = vpop.f32.mrf.mxu0
        %v1190 = vadd.f32 0.0, %v1189
        %1191 = vdwg.mxu0
        %v1192 = vadd.f32 %v1167, %v1190
        %1193 = vrot.lane.b32.xlu0 %v236, 16
        %v1194 = vpop.permute.xlu0 %1193
        %v1195 = vsel %vm279, %v1194, 0
        %1197 = vmatpush.msra.mxu0 0.0
        %1198 = vmatpush.msra.mxu0 0.0
        %1199 = vmatpush.msra.mxu0 0.0
        %1200 = vmatpush.msra.mxu0 0.0
        %1201 = vmatpush.msra.mxu0 0.0
        %1202 = vmatpush.msra.mxu0 0.0
        %1203 = vmatpush.msra.mxu0 0.0
        %1204 = vmatpush.msra.mxu0 0.0
        %1205 = vmatpush.msra.mxu0 0.0
        %1206 = vmatpush.msra.mxu0 0.0
        %1207 = vmatpush.msra.mxu0 0.0
        %1208 = vmatpush.msra.mxu0 0.0
        %1209 = vmatpush.msra.mxu0 0.0
        %1210 = vmatpush.msra.mxu0 0.0
        %1211 = vmatpush.msra.mxu0 %v269
        %1212 = vmatpush.msra.mxu0 %v268
        %1213 = vmatmul.f32.gmra.mxu0 %v1195
        %v1214 = vpop.f32.mrf.mxu0
        %v1215 = vadd.f32 0.0, %v1214
        %1216 = vdwg.mxu0
        %v1217 = vadd.f32 %v1192, %v1215
        %1218 = vrot.lane.b32.xlu0 %v239, 16
        %v1219 = vpop.permute.xlu0 %1218
        %v1220 = vsel %vm279, %v1219, 0
        %1222 = vmatpush.msra.mxu0 0.0
        %1223 = vmatpush.msra.mxu0 0.0
        %1224 = vmatpush.msra.mxu0 0.0
        %1225 = vmatpush.msra.mxu0 0.0
        %1226 = vmatpush.msra.mxu0 0.0
        %1227 = vmatpush.msra.mxu0 0.0
        %1228 = vmatpush.msra.mxu0 0.0
        %1229 = vmatpush.msra.mxu0 0.0
        %1230 = vmatpush.msra.mxu0 0.0
        %1231 = vmatpush.msra.mxu0 0.0
        %1232 = vmatpush.msra.mxu0 0.0
        %1233 = vmatpush.msra.mxu0 0.0
        %1234 = vmatpush.msra.mxu0 0.0
        %1235 = vmatpush.msra.mxu0 0.0
        %1236 = vmatpush.msra.mxu0 %v277
        %1237 = vmatpush.msra.mxu0 %v276
        %1238 = vmatmul.f32.gmra.mxu0 %v1220
        %v1239 = vpop.f32.mrf.mxu0
        %v1240 = vadd.f32 0.0, %v1239
        %1241 = vdwg.mxu0
        %v1242 = vadd.f32 %v1217, %v1240
        %v1244 = vrot.slane %v1242, 1
        %v1245 = vrot.slane %v1242, 2
        %v1246 = vrot.slane %v1242, 3
        %v1247 = vrot.slane %v1242, 4
        %v1248 = vrot.slane %v1242, 5
        %v1249 = vrot.slane %v1242, 6
        %v1250 = vrot.slane %v1242, 7
        %1258 = vst.msk [vmem:[%s181 + $0x7] sm:$0x1] %vm396, %v1242
        %1259 = vst.msk [vmem:[%s181 + $0xf] sm:$0x1] %vm396, %v1244
        %1260 = vst.msk [vmem:[%s181 + $0x17] sm:$0x1] %vm396, %v1245
        %1261 = vst.msk [vmem:[%s181 + $0x1f] sm:$0x1] %vm396, %v1246
        %1262 = vst.msk [vmem:[%s181 + $0x27] sm:$0x1] %vm396, %v1247
        %1263 = vst.msk [vmem:[%s181 + $0x2f] sm:$0x1] %vm396, %v1248
        %1264 = vst.msk [vmem:[%s181 + $0x37] sm:$0x1] %vm396, %v1249
        %1265 = vst.msk [vmem:[%s181 + $0x3f] sm:$0x1] %vm396, %v1250
        %s1266 = sand.u32 %s106, 1
        %s1267 = sand.u32 %s106, 1
        %s1268 = smul.addr %s1267, 64
        %s1269 = scalar_lea.vmem [#allocation2], %s1268
        // Predicated region
        $region33: #{upsample_forward.1} parent=31 // pred_check
          %p1270 = pneg %p116
        $region34: #{upsample_forward.1} parent=31 // pred_check_branch
          %1272 = sbr.rel (%p1270) target = $region36
        $region35: #{upsample_forward.1} parent=31 // pred_region
          %s1273 = smul.addr %s18, 16
          %s1274 = sadd.s32 %s19, %s1273
          %s1275 = smul.addr %s1274, 8
          %s1276 = scalar_lea.vmem %s3, %s1275
          // Predicated region
          $region37: #{upsample_forward.1} parent=35 // pred_check
            _
          $region38: #{upsample_forward.1} parent=35 // pred_check_branch
            %1278 = sbr.rel (0) target = $region40
          $region39: #{upsample_forward.1} parent=35 // pred_region
            // Predicated region
            $region41: #{upsample_forward.1} parent=39 // pred_check
              _
            $region42: #{upsample_forward.1} parent=39 // pred_check_branch
              %1280 = sbr.rel (0) target = $region44
            $region43: #{upsample_forward.1} parent=39 // pred_region
              // Predicated region
              $region56: #{upsample_forward.1} parent=43 // pred_check
                _
              $region57: #{upsample_forward.1} parent=43 // pred_check_branch
                %1310 = sbr.rel (0) target = $region59
              $region58: #{upsample_forward.1} parent=43 // pred_region
                loop: start=0, step=1, limit=1
                $region60: #{upsample_forward.1} parent=58 // loop_pre_header
                  _
                $region61: #{upsample_forward.1} parent=58 // loop_header
                  %s1312 = sphi 0, %s1316
                  %p1313 = scmp.ge.s32.totalorder %s1312, 1
                  %s1317 = sphi %s1269, %s1269
                  %s1318 = sphi %s1276, %s1276
                $region62: #{upsample_forward.1} parent=58 // loop_header_branch
                  %1315 = sbr.rel (%p1313) target = $region66
                $region63: #{upsample_forward.1} parent=58 // loop_body
                  %v1319 = vld [vmem:[%s1317] sm:$0xff]
                  %1320 = vst [vmem:[%s1318] sm:$0xff] %v1319
                  %v1321 = vld [vmem:[%s1317 + $0x8] sm:$0xff]
                  %1322 = vst [vmem:[%s1318 + $0x10] sm:$0xff] %v1321
                  %v1323 = vld [vmem:[%s1317 + $0x10] sm:$0xff]
                  %1324 = vst [vmem:[%s1318 + $0x20] sm:$0xff] %v1323
                  %v1325 = vld [vmem:[%s1317 + $0x18] sm:$0xff]
                  %1326 = vst [vmem:[%s1318 + $0x30] sm:$0xff] %v1325
                  %v1327 = vld [vmem:[%s1317 + $0x20] sm:$0xff]
                  %1328 = vst [vmem:[%s1318 + $0x40] sm:$0xff] %v1327
                  %v1329 = vld [vmem:[%s1317 + $0x28] sm:$0xff]
                  %1330 = vst [vmem:[%s1318 + $0x50] sm:$0xff] %v1329
                  %v1331 = vld [vmem:[%s1317 + $0x30] sm:$0xff]
                  %1332 = vst [vmem:[%s1318 + $0x60] sm:$0xff] %v1331
                  %v1333 = vld [vmem:[%s1317 + $0x38] sm:$0xff]
                  %1334 = vst [vmem:[%s1318 + $0x70] sm:$0xff] %v1333
                $region64: #{upsample_forward.1} parent=58 // loop_footer
                  %s1316 = sadd.s32 1, %s1312
                $region65: #{upsample_forward.1} parent=58 // loop_footer_branch
                  %1311 = sbr.rel target = $region61
                $region66: #{upsample_forward.1} parent=58 // loop_exit
                  _
              $region59: #{upsample_forward.1} parent=43 // pred_fallthru
                _
              // Predicated region
              $region67: #{upsample_forward.1} parent=43 // pred_check
                _
              $region68: #{upsample_forward.1} parent=43 // pred_check_branch
                %1336 = sbr.rel target = $region70
              $region69: #{upsample_forward.1} parent=43 // pred_region
                _
              $region70: #{upsample_forward.1} parent=43 // pred_fallthru
                _
            $region44: #{upsample_forward.1} parent=39 // pred_fallthru
              _
            // Predicated region
            $region45: #{upsample_forward.1} parent=39 // pred_check
              _
            $region46: #{upsample_forward.1} parent=39 // pred_check_branch
              %1282 = sbr.rel target = $region48
            $region47: #{upsample_forward.1} parent=39 // pred_region
              %s1284 = ssub.s32 256, 1
              loop: start=0, step=1, limit=1
              $region49: #{upsample_forward.1} parent=47 // loop_pre_header
                _
              $region50: #{upsample_forward.1} parent=47 // loop_header
                %s1286 = sphi 0, %s1290
                %p1287 = scmp.ge.s32.totalorder %s1286, 1
                %s1291 = sphi %s1269, %s1269
                %s1292 = sphi %s1276, %s1276
              $region51: #{upsample_forward.1} parent=47 // loop_header_branch
                %1289 = sbr.rel (%p1287) target = $region55
              $region52: #{upsample_forward.1} parent=47 // loop_body
                %v1293 = vld [vmem:[%s1291] sm:%s1284]
                %1294 = vst [vmem:[%s1292] sm:%s1284] %v1293
                %v1295 = vld [vmem:[%s1291 + $0x8] sm:%s1284]
                %1296 = vst [vmem:[%s1292 + $0x10] sm:%s1284] %v1295
                %v1297 = vld [vmem:[%s1291 + $0x10] sm:%s1284]
                %1298 = vst [vmem:[%s1292 + $0x20] sm:%s1284] %v1297
                %v1299 = vld [vmem:[%s1291 + $0x18] sm:%s1284]
                %1300 = vst [vmem:[%s1292 + $0x30] sm:%s1284] %v1299
                %v1301 = vld [vmem:[%s1291 + $0x20] sm:%s1284]
                %1302 = vst [vmem:[%s1292 + $0x40] sm:%s1284] %v1301
                %v1303 = vld [vmem:[%s1291 + $0x28] sm:%s1284]
                %1304 = vst [vmem:[%s1292 + $0x50] sm:%s1284] %v1303
                %v1305 = vld [vmem:[%s1291 + $0x30] sm:%s1284]
                %1306 = vst [vmem:[%s1292 + $0x60] sm:%s1284] %v1305
                %v1307 = vld [vmem:[%s1291 + $0x38] sm:%s1284]
                %1308 = vst [vmem:[%s1292 + $0x70] sm:%s1284] %v1307
              $region53: #{upsample_forward.1} parent=47 // loop_footer
                %s1290 = sadd.s32 1, %s1286
              $region54: #{upsample_forward.1} parent=47 // loop_footer_branch
                %1285 = sbr.rel target = $region50
              $region55: #{upsample_forward.1} parent=47 // loop_exit
                _
            $region48: #{upsample_forward.1} parent=39 // pred_fallthru
              _
          $region40: #{upsample_forward.1} parent=35 // pred_fallthru
            _
          %1337 = vnop
        $region36: #{upsample_forward.1} parent=31 // pred_fallthru
          _
      $region32: #{upsample_forward.1} parent=5 // pred_fallthru
        _
      %p1338 = scmp.le.s32.totalorder 2, %s9
      // Predicated region
      $region71: #{upsample_forward.1} parent=5 // pred_check
        %p1339 = pneg %p1338
      $region72: #{upsample_forward.1} parent=5 // pred_check_branch
        %1341 = sbr.rel (%p1339) target = $region74
      $region73: #{upsample_forward.1} parent=5 // pred_region
        %s1342 = ssub.s32 %s9, 2
        // Predicated region
        $region75: #{upsample_forward.1} parent=73 // pred_check
          %p1343 = pneg %p122
        $region76: #{upsample_forward.1} parent=73 // pred_check_branch
          %1345 = sbr.rel (%p1343) target = $region78
        $region77: #{upsample_forward.1} parent=73 // pred_region
          %s1346 = sand.u32 %s107, 1
          %s1347 = sand.u32 %s107, 1
          %s1348 = smul.addr %s1347, 64
          %s1349 = scalar_lea.vmem [#allocation2], %s1348
        $region78: #{upsample_forward.1} parent=73 // pred_fallthru
          _
      $region74: #{upsample_forward.1} parent=5 // pred_fallthru
        _
    $region6: #{upsample_forward.1} parent=1 // loop_footer
      %s13 = sadd.s32 1, %s9
    $region7: #{upsample_forward.1} parent=1 // loop_footer_branch
      %8 = sbr.rel target = $region3
    $region8: #{upsample_forward.1} parent=1 // loop_exit
      _

</llo_original>
